<compile_context>
chip_gen: v5e
topology: v5e:2x2
jax: 0.10.0
libtpu: 0.0.40
codegen_flags: <defaults>
</compile_context>

<pallas_src>
import functools

import jax
import jax.numpy as jnp
from jax import lax
from jax.experimental import pallas as pl
from jax.experimental.pallas import tpu as pltpu


# ------------------------------ small helpers -------------------------------

def _round_up(v, m):
    return -(-v // m) * m


@functools.lru_cache(maxsize=None)
def _vmem_limit():
    """Generation-aware scoped-VMEM cap: ~3/4 of physical VMEM (96 MiB on
    128 MiB v5e/v6e parts, 48 MiB on 64 MiB v7x parts); safe fallback 48 MiB."""
    try:
        cap = getattr(pltpu.get_tpu_info(), "vmem_capacity_bytes", None)
        if cap:
            return int(min(cap * 3 // 4, 100 * 1024 * 1024))
    except Exception:
        pass
    return 48 * 1024 * 1024


def _compiler_params(sem):
    return pltpu.CompilerParams(dimension_semantics=sem,
                                vmem_limit_bytes=_vmem_limit())


def _batch_tile(B, N, target_rows=512):
    """Images carried per grid step: the largest divisor of B keeping bt*N rows
    at or below target_rows (better MXU row occupancy, fewer grid steps)."""
    bt = 1
    for cand in range(2, B + 1):
        if B % cand == 0 and cand * N <= target_rows:
            bt = cand
    return bt


def _row_tiling(M, max_rows=512):
    tm = min(max_rows, _round_up(M, 8))
    return tm, _round_up(M, tm)


def _gelu_tanh(x):
    # TODO(synk): PyTorch nn.GELU default is exact erf; tanh approximation kept
    # for guaranteed Mosaic lowering (EUP tanh). ~1e-3-level deviation.
    c = jnp.float32(0.7978845608028654)  # sqrt(2/pi)
    return 0.5 * x * (1.0 + jnp.tanh(c * (x + 0.044715 * x * x * x)))


def _ln(x, g, b, eps):
    mu = jnp.mean(x, axis=-1, keepdims=True)
    var = jnp.mean((x - mu) ** 2, axis=-1, keepdims=True)
    return (x - mu) * lax.rsqrt(var + eps) * g + b


# ----------------------------- Pallas kernels ------------------------------

def patch_embed_kernel(p_ref, w_ref, b_ref, pos_ref, o_ref):
    # p_ref: (rows, C*P*P) patch rows; fused matmul + bias + pos-embed.
    p = p_ref[...].astype(jnp.bfloat16)
    y = jnp.dot(p, w_ref[...], preferred_element_type=jnp.float32)
    o_ref[...] = (y + b_ref[...] + pos_ref[...]).astype(o_ref.dtype)


def pallas_patch_embed(patches2d, w, b, pos_tile, *, rows):
    M, CPP = patches2d.shape
    D = w.shape[1]
    return pl.pallas_call(
        patch_embed_kernel,
        out_shape=jax.ShapeDtypeStruct((M, D), jnp.float32),
        grid=(M // rows,),
        in_specs=[
            pl.BlockSpec((rows, CPP), lambda i: (i, 0)),
            pl.BlockSpec((CPP, D), lambda i: (0, 0)),
            pl.BlockSpec((1, D), lambda i: (0, 0)),
            pl.BlockSpec((rows, D), lambda i: (0, 0)),
        ],
        out_specs=pl.BlockSpec((rows, D), lambda i: (i, 0)),
        compiler_params=_compiler_params(("parallel",)),
    )(patches2d, w, b, pos_tile)


def blocks_kernel(x_ref, ln1_g, ln1_b, qkv_w, qkv_b, proj_w, proj_b,
                  ln2_g, ln2_b, fc1_w, fc1_b, fc2_w, fc2_b,
                  o_ref, res_ref, *, eps, n_heads, n_img, n_tok):
    """One grid step = one transformer block (depth axis) applied to the
    resident residual stream of n_img images (batch-tile axis)."""
    l = pl.program_id(1)

    @pl.when(l == 0)
    def _():
        res_ref[...] = x_ref[...].astype(jnp.float32)

    x = res_ref[...]                                     # (n_img*n_tok, D) f32
    D = x.shape[-1]
    dh = D // n_heads
    scale = float(dh) ** -0.5

    # --- attention: LN1 + ONE lane-dense QKV matmul + per-(image,head) SDPA
    #     + ONE full-D output projection ---
    y = _ln(x, ln1_g[...], ln1_b[...], eps).astype(jnp.bfloat16)
    qkv = jnp.dot(y, qkv_w[...], preferred_element_type=jnp.float32) + qkv_b[...]
    per_image = []
    for i in range(n_img):
        r0 = i * n_tok
        heads = []
        for h in range(n_heads):
            q = qkv[r0:r0 + n_tok, h * dh:(h + 1) * dh] * scale
            k = qkv[r0:r0 + n_tok, D + h * dh:D + (h + 1) * dh]
            v = qkv[r0:r0 + n_tok, 2 * D + h * dh:2 * D + (h + 1) * dh]
            # scale folded into q; NT contraction avoids an in-kernel K transpose.
            s = lax.dot_general(q.astype(jnp.bfloat16), k.astype(jnp.bfloat16),
                                (((1,), (1,)), ((), ())),
                                preferred_element_type=jnp.float32)
            s = s - jnp.max(s, axis=-1, keepdims=True)
            p = jnp.exp(s)
            p = p * pl.reciprocal(jnp.sum(p, axis=-1, keepdims=True), approx=True)
            heads.append(jnp.dot(p.astype(jnp.bfloat16), v.astype(jnp.bfloat16),
                                 preferred_element_type=jnp.float32))
        per_image.append(jnp.concatenate(heads, axis=-1))         # (n_tok, D)
    attn = jnp.concatenate(per_image, axis=0).astype(jnp.bfloat16)
    x = x + jnp.dot(attn, proj_w[...], preferred_element_type=jnp.float32) + proj_b[...]

    # --- MLP: LN2 + FC1 + GELU + FC2 + residual ---
    y = _ln(x, ln2_g[...], ln2_b[...], eps).astype(jnp.bfloat16)
    z = jnp.dot(y, fc1_w[...], preferred_element_type=jnp.float32) + fc1_b[...]
    z = _gelu_tanh(z).astype(jnp.bfloat16)
    x = x + jnp.dot(z, fc2_w[...], preferred_element_type=jnp.float32) + fc2_b[...]

    res_ref[...] = x

    @pl.when(l == pl.num_programs(1) - 1)
    def _():
        o_ref[...] = x.astype(o_ref.dtype)


def pallas_blocks(x2d, bw, *, n_heads, n_tok, bt, eps):
    M, D = x2d.shape
    L, _, d3 = bw["qkv_w"].shape
    hidden = bw["fc1_w"].shape[2]
    rows = bt * n_tok
    nb = M // rows

    def wspec(s1, s2):
        # per-block weight, streamed down the depth grid axis
        return pl.BlockSpec((None, s1, s2), lambda b, l: (l, 0, 0))

    kernel = functools.partial(blocks_kernel, eps=eps, n_heads=n_heads,
                               n_img=bt, n_tok=n_tok)
    # TODO(synk): on v7x mark the batch-tile axis pltpu.CORE_PARALLEL (2 TCs),
    # single-buffer truly constant specs via pl.Buffered(1), and flash-tile the
    # token dim for N >~ 1024; kept portable / conservative here.
    return pl.pallas_call(
        kernel,
        out_shape=jax.ShapeDtypeStruct((M, D), jnp.float32),
        grid=(nb, L),
        in_specs=[
            pl.BlockSpec((rows, D), lambda b, l: (b, 0)),
            wspec(1, D), wspec(1, D),
            wspec(D, d3), wspec(1, d3),
            wspec(D, D), wspec(1, D),
            wspec(1, D), wspec(1, D),
            wspec(D, hidden), wspec(1, hidden),
            wspec(hidden, D), wspec(1, D),
        ],
        out_specs=pl.BlockSpec((rows, D), lambda b, l: (b, 0)),
        scratch_shapes=[pltpu.VMEM((rows, D), jnp.float32)],
        compiler_params=_compiler_params(("parallel", "arbitrary")),
    )(x2d, bw["ln1_g"], bw["ln1_b"], bw["qkv_w"], bw["qkv_b"],
      bw["proj_w"], bw["proj_b"], bw["ln2_g"], bw["ln2_b"],
      bw["fc1_w"], bw["fc1_b"], bw["fc2_w"], bw["fc2_b"])


def final_head_kernel(x_ref, g_ref, b_ref, w_ref, hb_ref, o_ref, *, eps):
    # Fused final LayerNorm + linear decoder head (output padded to 128 lanes).
    x = x_ref[...].astype(jnp.float32)
    y = _ln(x, g_ref[...], b_ref[...], eps).astype(jnp.bfloat16)
    o = jnp.dot(y, w_ref[...], preferred_element_type=jnp.float32) + hb_ref[...]
    o_ref[...] = o.astype(o_ref.dtype)


def pallas_final_head(x, g, b, w, hb, *, eps):
    M, D = x.shape
    ncols = w.shape[1]                                # already padded to %128
    tm, m_pad = _row_tiling(M)
    if m_pad != M:
        x = jnp.pad(x, ((0, m_pad - M), (0, 0)))
    kernel = functools.partial(final_head_kernel, eps=eps)
    out = pl.pallas_call(
        kernel,
        out_shape=jax.ShapeDtypeStruct((m_pad, ncols), jnp.float32),
        grid=(m_pad // tm,),
        in_specs=[
            pl.BlockSpec((tm, D), lambda i: (i, 0)),
            pl.BlockSpec((1, D), lambda i: (0, 0)),
            pl.BlockSpec((1, D), lambda i: (0, 0)),
            pl.BlockSpec((D, ncols), lambda i: (0, 0)),
            pl.BlockSpec((1, ncols), lambda i: (0, 0)),
        ],
        out_specs=pl.BlockSpec((tm, ncols), lambda i: (i, 0)),
        compiler_params=_compiler_params(("parallel",)),
    )(x, g, b, w, hb)
    return out[:M]


# ------------------------------- ViT forward -------------------------------

def extract_patches(images, P):
    """NCHW -> (B*N, C*P*P), patch vector ordered (C, ph, pw) like Conv2d."""
    B, C, H, W = images.shape
    x = images.reshape(B, C, H // P, P, W // P, P)
    x = x.transpose(0, 2, 4, 1, 3, 5)             # B, Hp, Wp, C, P, P
    return x.reshape(B * (H // P) * (W // P), C * P * P)


def prepare_params(params):
    """One-time layout prep (folded into the jit):
      * matmul weights cast to bf16 (MXU bf16 path, half weight HBM traffic)
      * per-block weights stacked along a leading depth axis so ONE pallas_call
        streams them along the depth grid axis
      * decoder head padded to a multiple of 128 output columns
      * biases / LN params kept f32 as (1, X) rows."""
    bf = lambda w: w.astype(jnp.bfloat16)
    row = lambda v: v.reshape(1, -1)
    n_cls = params["head_w"].shape[1]
    ncols = _round_up(n_cls, 128)
    blocks = params["blocks"]
    stack = lambda f: jnp.stack([f(b) for b in blocks])
    return {
        "patch_w": bf(params["patch_w"]),
        "patch_b": row(params["patch_b"]),
        "pos_embed": params["pos_embed"][0],                       # (N, D) f32
        "ln_f_g": row(params["ln_f_g"]),
        "ln_f_b": row(params["ln_f_b"]),
        "head_w": bf(jnp.pad(params["head_w"], ((0, 0), (0, ncols - n_cls)))),
        "head_b": row(jnp.pad(params["head_b"], (0, ncols - n_cls))),
        "blk": {
            "ln1_g": stack(lambda b: row(b["ln1_g"])),             # (L, 1, D)
            "ln1_b": stack(lambda b: row(b["ln1_b"])),
            "qkv_w": bf(stack(lambda b: b["qkv_w"])),              # (L, D, 3D)
            "qkv_b": stack(lambda b: row(b["qkv_b"])),             # (L, 1, 3D)
            "proj_w": bf(stack(lambda b: b["proj_w"])),            # (L, D, D)
            "proj_b": stack(lambda b: row(b["proj_b"])),
            "ln2_g": stack(lambda b: row(b["ln2_g"])),
            "ln2_b": stack(lambda b: row(b["ln2_b"])),
            "fc1_w": bf(stack(lambda b: b["fc1_w"])),              # (L, D, Hd)
            "fc1_b": stack(lambda b: row(b["fc1_b"])),
            "fc2_w": bf(stack(lambda b: b["fc2_w"])),              # (L, Hd, D)
            "fc2_b": stack(lambda b: row(b["fc2_b"])),
        },
    }


def vit_linear_decoder_forward(params, images, cfg):
    B, C, H, W = images.shape
    P, D = cfg["patch"], cfg["dim"]
    n_heads, n_cls = cfg["heads"], cfg["n_cls"]
    Hp, Wp = H // P, W // P
    N = Hp * Wp
    eps = cfg.get("ln_eps", 1e-5)  # PyTorch nn.LayerNorm default

    pp = prepare_params(params)
    bt = _batch_tile(B, N)
    rows = bt * N

    # patch embedding (= Conv2d(C, D, kernel=P, stride=P)) + pos-embed, fused;
    # whole trunk runs on a lane-dense flat (B*N, D) activation slab.
    patches = extract_patches(images, P)                       # (B*N, C*P*P)
    pos_tile = jnp.tile(pp["pos_embed"], (bt, 1))              # (bt*N, D)
    x = pallas_patch_embed(patches, pp["patch_w"], pp["patch_b"], pos_tile,
                           rows=rows)                          # (B*N, D)

    # all transformer blocks in ONE pallas_call: grid=(batch tiles, depth),
    # residual stream resident in VMEM scratch across the depth axis.
    x = pallas_blocks(x, pp["blk"], n_heads=n_heads, n_tok=N, bt=bt, eps=eps)

    # fused final LN + linear decoder head (lane-dense 128-padded output)
    logits = pallas_final_head(x, pp["ln_f_g"], pp["ln_f_b"],
                               pp["head_w"], pp["head_b"], eps=eps)
    logits = logits[:, :n_cls].reshape(B, Hp, Wp, n_cls).transpose(0, 3, 1, 2)
    # F.interpolate(..., mode='bilinear', align_corners=False) equivalent
    return jax.image.resize(logits, (B, n_cls, H, W), method="bilinear")


# ------------------------------ parameter init -----------------------------

def init_params(key, cfg):
    D, P, C = cfg["dim"], cfg["patch"], cfg["in_chans"]
    N = (cfg["img"] // P) ** 2
    keys = jax.random.split(key, 4 + cfg["depth"])

    def dense(k, fan_in, fan_out):
        return jax.random.normal(k, (fan_in, fan_out), jnp.float32) * 0.02

    params = {
        "patch_w": dense(keys[0], C * P * P, D),
        "patch_b": jnp.zeros((D,), jnp.float32),
        "pos_embed": jax.random.normal(keys[1], (1, N, D), jnp.float32) * 0.02,
        "ln_f_g": jnp.ones((D,), jnp.float32),
        "ln_f_b": jnp.zeros((D,), jnp.float32),
        "head_w": dense(keys[2], D, cfg["n_cls"]),
        "head_b": jnp.zeros((cfg["n_cls"],), jnp.float32),
        "blocks": [],
    }
    for i in range(cfg["depth"]):
        bk = jax.random.split(keys[4 + i], 4)
        params["blocks"].append({
            "ln1_g": jnp.ones((D,), jnp.float32),
            "ln1_b": jnp.zeros((D,), jnp.float32),
            "qkv_w": dense(bk[0], D, 3 * D),
            "qkv_b": jnp.zeros((3 * D,), jnp.float32),
            "proj_w": dense(bk[1], D, D),
            "proj_b": jnp.zeros((D,), jnp.float32),
            "ln2_g": jnp.ones((D,), jnp.float32),
            "ln2_b": jnp.zeros((D,), jnp.float32),
            "fc1_w": dense(bk[2], D, cfg["mlp"]),
            "fc1_b": jnp.zeros((cfg["mlp"],), jnp.float32),
            "fc2_w": dense(bk[3], cfg["mlp"], D),
            "fc2_b": jnp.zeros((D,), jnp.float32),
        })
    return params


# ----------------------------------- main -----------------------------------

if __name__ == "__main__":
    cfg = dict(img=16, patch=4, in_chans=3, dim=32, heads=4,
               depth=2, mlp=128, n_cls=4)
    key = jax.random.PRNGKey(0)
    pkey, xkey = jax.random.split(key)
    params = init_params(pkey, cfg)
    images = jax.random.normal(
        xkey, (2, cfg["in_chans"], cfg["img"], cfg["img"]), jnp.float32)

    fwd = jax.jit(lambda p, x: vit_linear_decoder_forward(p, x, cfg))
    out = fwd(params, images)
    jax.block_until_ready(out)
    assert out.shape == (2, cfg["n_cls"], cfg["img"], cfg["img"]), out.shape
    assert bool(jnp.all(jnp.isfinite(out)))
    print("KERNEL_OK")
</pallas_src>

<mosaic_0001>
module attributes {stable_mosaic.version = 11 : i64} {
  func.func @patch_embed_kernel(%arg0: i32, %arg1: memref<32x48xf32, #tpu.memory_space<vmem>>, %arg2: memref<48x32xbf16, #tpu.memory_space<vmem>>, %arg3: memref<1x32xf32, #tpu.memory_space<vmem>>, %arg4: memref<32x32xf32, #tpu.memory_space<vmem>>, %arg5: memref<32x32xf32, #tpu.memory_space<vmem>>) attributes {dimension_semantics = [#tpu.dimension_semantics<parallel>], iteration_bounds = array<i64: 1>, scalar_prefetch = 0 : i64, scratch_operands = 0 : i64, tpu.core_type = #tpu.core_type<tc>, window_params = [{transform_indices = @transform_0, window_bounds = array<i64: 32, 48>}, {pipeline_mode = #tpu.pipeline_mode<synchronous>, transform_indices = @transform_1, window_bounds = array<i64: 48, 32>}, {pipeline_mode = #tpu.pipeline_mode<synchronous>, transform_indices = @transform_2, window_bounds = array<i64: 1, 32>}, {pipeline_mode = #tpu.pipeline_mode<synchronous>, transform_indices = @transform_3, window_bounds = array<i64: 32, 32>}, {transform_indices = @transform_4, window_bounds = array<i64: 32, 32>}]} {
    %c0 = arith.constant 0 : index
    %c0_0 = arith.constant 0 : index
    %0 = vector.load %arg1[%c0, %c0_0] : memref<32x48xf32, #tpu.memory_space<vmem>>, vector<32x48xf32>
    %1 = arith.truncf %0 : vector<32x48xf32> to vector<32x48xbf16>
    %c0_1 = arith.constant 0 : index
    %c0_2 = arith.constant 0 : index
    %2 = vector.load %arg2[%c0_1, %c0_2] : memref<48x32xbf16, #tpu.memory_space<vmem>>, vector<48x32xbf16>
    %cst = arith.constant dense<0.000000e+00> : vector<32x32xf32>
    %3 = tpu.matmul %1, %2, %cst {dimension_numbers = #tpu.dot_dimension_numbers<[1], [0], [0], [1], [0, 0, 1, 1], [], []>} : vector<32x48xbf16>, vector<48x32xbf16>, vector<32x32xf32> -> vector<32x32xf32>
    %c0_3 = arith.constant 0 : index
    %c0_4 = arith.constant 0 : index
    %4 = vector.load %arg3[%c0_3, %c0_4] : memref<1x32xf32, #tpu.memory_space<vmem>>, vector<1x32xf32>
    %5 = vector.broadcast %4 : vector<1x32xf32> to vector<32x32xf32>
    %6 = arith.addf %3, %5 : vector<32x32xf32>
    %c0_5 = arith.constant 0 : index
    %c0_6 = arith.constant 0 : index
    %7 = vector.load %arg4[%c0_5, %c0_6] : memref<32x32xf32, #tpu.memory_space<vmem>>, vector<32x32xf32>
    %8 = arith.addf %6, %7 : vector<32x32xf32>
    %c0_7 = arith.constant 0 : index
    %c0_8 = arith.constant 0 : index
    %9 = vector.load %arg5[%c0_7, %c0_8] : memref<32x32xf32, #tpu.memory_space<vmem>>, vector<32x32xf32>
    tpu.vector_store %arg5[%c0_7, %c0_8], %8 {strides = array<i32>} : memref<32x32xf32, #tpu.memory_space<vmem>>, vector<32x32xf32>,
    return
  }
  func.func @transform_0(%arg0: i32) -> (i32, i32) {
    %c0_i32 = arith.constant 0 : i32
    %c0_i32_0 = arith.constant 0 : i32
    return %arg0, %c0_i32 : i32, i32
  }
  func.func @transform_1(%arg0: i32) -> (i32, i32) {
    %c0_i32 = arith.constant 0 : i32
    %c0_i32_0 = arith.constant 0 : i32
    %c0_i32_1 = arith.constant 0 : i32
    return %c0_i32, %c0_i32_0 : i32, i32
  }
  func.func @transform_2(%arg0: i32) -> (i32, i32) {
    %c0_i32 = arith.constant 0 : i32
    %c0_i32_0 = arith.constant 0 : i32
    %c0_i32_1 = arith.constant 0 : i32
    return %c0_i32, %c0_i32_0 : i32, i32
  }
  func.func @transform_3(%arg0: i32) -> (i32, i32) {
    %c0_i32 = arith.constant 0 : i32
    %c0_i32_0 = arith.constant 0 : i32
    %c0_i32_1 = arith.constant 0 : i32
    return %c0_i32, %c0_i32_0 : i32, i32
  }
  func.func @transform_4(%arg0: i32) -> (i32, i32) {
    %c0_i32 = arith.constant 0 : i32
    %c0_i32_0 = arith.constant 0 : i32
    return %arg0, %c0_i32 : i32, i32
  }
}

module attributes {stable_mosaic.version = 11 : i64} {
  func.func @final_head_kernel(%arg0: i32, %arg1: memref<32x32xf32, #tpu.memory_space<vmem>>, %arg2: memref<1x32xf32, #tpu.memory_space<vmem>>, %arg3: memref<1x32xf32, #tpu.memory_space<vmem>>, %arg4: memref<32x128xbf16, #tpu.memory_space<vmem>>, %arg5: memref<1x128xf32, #tpu.memory_space<vmem>>, %arg6: memref<32x128xf32, #tpu.memory_space<vmem>>) attributes {dimension_semantics = [#tpu.dimension_semantics<parallel>], iteration_bounds = array<i64: 1>, scalar_prefetch = 0 : i64, scratch_operands = 0 : i64, tpu.core_type = #tpu.core_type<tc>, window_params = [{transform_indices = @transform_0, window_bounds = array<i64: 32, 32>}, {pipeline_mode = #tpu.pipeline_mode<synchronous>, transform_indices = @transform_1, window_bounds = array<i64: 1, 32>}, {pipeline_mode = #tpu.pipeline_mode<synchronous>, transform_indices = @transform_2, window_bounds = array<i64: 1, 32>}, {pipeline_mode = #tpu.pipeline_mode<synchronous>, transform_indices = @transform_3, window_bounds = array<i64: 32, 128>}, {pipeline_mode = #tpu.pipeline_mode<synchronous>, transform_indices = @transform_4, window_bounds = array<i64: 1, 128>}, {transform_indices = @transform_5, window_bounds = array<i64: 32, 128>}]} {
    %c0 = arith.constant 0 : index
    %c0_0 = arith.constant 0 : index
    %0 = vector.load %arg1[%c0, %c0_0] : memref<32x32xf32, #tpu.memory_space<vmem>>, vector<32x32xf32>
    %c0_1 = arith.constant 0 : index
    %c0_2 = arith.constant 0 : index
    %1 = vector.load %arg2[%c0_1, %c0_2] : memref<1x32xf32, #tpu.memory_space<vmem>>, vector<1x32xf32>
    %c0_3 = arith.constant 0 : index
    %c0_4 = arith.constant 0 : index
    %2 = vector.load %arg3[%c0_3, %c0_4] : memref<1x32xf32, #tpu.memory_space<vmem>>, vector<1x32xf32>
    %cst = arith.constant dense<0.000000e+00> : vector<32xf32>
    %3 = vector.multi_reduction <add>, %0, %cst [1] : vector<32x32xf32> to vector<32xf32>
    %4 = vector.shape_cast %3 : vector<32xf32> to vector<32x1xf32>
    %cst_5 = arith.constant 3.200000e+01 : f32
    %5 = vector.broadcast %cst_5 : f32 to vector<32x1xf32>
    %6 = arith.divf %4, %5 : vector<32x1xf32>
    %7 = vector.broadcast %6 : vector<32x1xf32> to vector<32x32xf32>
    %8 = arith.subf %0, %7 : vector<32x32xf32>
    %9 = arith.mulf %8, %8 : vector<32x32xf32>
    %cst_6 = arith.constant dense<0.000000e+00> : vector<32xf32>
    %10 = vector.multi_reduction <add>, %9, %cst_6 [1] : vector<32x32xf32> to vector<32xf32>
    %11 = vector.shape_cast %10 : vector<32xf32> to vector<32x1xf32>
    %cst_7 = arith.constant 3.200000e+01 : f32
    %12 = vector.broadcast %cst_7 : f32 to vector<32x1xf32>
    %13 = arith.divf %11, %12 : vector<32x1xf32>
    %14 = vector.broadcast %6 : vector<32x1xf32> to vector<32x32xf32>
    %15 = arith.subf %0, %14 : vector<32x32xf32>
    %cst_8 = arith.constant 9.99999974E-6 : f32
    %16 = vector.broadcast %cst_8 : f32 to vector<32x1xf32>
    %17 = arith.addf %13, %16 : vector<32x1xf32>
    %18 = math.rsqrt %17 : vector<32x1xf32>
    %19 = vector.broadcast %18 : vector<32x1xf32> to vector<32x32xf32>
    %20 = arith.mulf %15, %19 : vector<32x32xf32>
    %21 = vector.broadcast %1 : vector<1x32xf32> to vector<32x32xf32>
    %22 = arith.mulf %20, %21 : vector<32x32xf32>
    %23 = vector.broadcast %2 : vector<1x32xf32> to vector<32x32xf32>
    %24 = arith.addf %22, %23 : vector<32x32xf32>
    %25 = arith.truncf %24 : vector<32x32xf32> to vector<32x32xbf16>
    %c0_9 = arith.constant 0 : index
    %c0_10 = arith.constant 0 : index
    %26 = vector.load %arg4[%c0_9, %c0_10] : memref<32x128xbf16, #tpu.memory_space<vmem>>, vector<32x128xbf16>
    %cst_11 = arith.constant dense<0.000000e+00> : vector<32x128xf32>
    %27 = tpu.matmul %25, %26, %cst_11 {dimension_numbers = #tpu.dot_dimension_numbers<[1], [0], [0], [1], [0, 0, 1, 1], [], []>} : vector<32x32xbf16>, vector<32x128xbf16>, vector<32x128xf32> -> vector<32x128xf32>
    %c0_12 = arith.constant 0 : index
    %c0_13 = arith.constant 0 : index
    %28 = vector.load %arg5[%c0_12, %c0_13] : memref<1x128xf32, #tpu.memory_space<vmem>>, vector<1x128xf32>
    %29 = vector.broadcast %28 : vector<1x128xf32> to vector<32x128xf32>
    %30 = arith.addf %27, %29 : vector<32x128xf32>
    %c0_14 = arith.constant 0 : index
    %c0_15 = arith.constant 0 : index
    %31 = vector.load %arg6[%c0_14, %c0_15] : memref<32x128xf32, #tpu.memory_space<vmem>>, vector<32x128xf32>
    tpu.vector_store %arg6[%c0_14, %c0_15], %30 {strides = array<i32>} : memref<32x128xf32, #tpu.memory_space<vmem>>, vector<32x128xf32>,
    return
  }
  func.func @transform_0(%arg0: i32) -> (i32, i32) {
    %c0_i32 = arith.constant 0 : i32
    %c0_i32_0 = arith.constant 0 : i32
    return %arg0, %c0_i32 : i32, i32
  }
  func.func @transform_1(%arg0: i32) -> (i32, i32) {
    %c0_i32 = arith.constant 0 : i32
    %c0_i32_0 = arith.constant 0 : i32
    %c0_i32_1 = arith.constant 0 : i32
    return %c0_i32, %c0_i32_0 : i32, i32
  }
  func.func @transform_2(%arg0: i32) -> (i32, i32) {
    %c0_i32 = arith.constant 0 : i32
    %c0_i32_0 = arith.constant 0 : i32
    %c0_i32_1 = arith.constant 0 : i32
    return %c0_i32, %c0_i32_0 : i32, i32
  }
  func.func @transform_3(%arg0: i32) -> (i32, i32) {
    %c0_i32 = arith.constant 0 : i32
    %c0_i32_0 = arith.constant 0 : i32
    %c0_i32_1 = arith.constant 0 : i32
    return %c0_i32, %c0_i32_0 : i32, i32
  }
  func.func @transform_4(%arg0: i32) -> (i32, i32) {
    %c0_i32 = arith.constant 0 : i32
    %c0_i32_0 = arith.constant 0 : i32
    %c0_i32_1 = arith.constant 0 : i32
    return %c0_i32, %c0_i32_0 : i32, i32
  }
  func.func @transform_5(%arg0: i32) -> (i32, i32) {
    %c0_i32 = arith.constant 0 : i32
    %c0_i32_0 = arith.constant 0 : i32
    return %arg0, %c0_i32 : i32, i32
  }
}

module attributes {stable_mosaic.version = 11 : i64} {
  func.func @blocks_kernel(%arg0: i32, %arg1: i32, %arg2: memref<32x32xf32, #tpu.memory_space<vmem>>, %arg3: memref<1x1x32xf32, #tpu.memory_space<vmem>>, %arg4: memref<1x1x32xf32, #tpu.memory_space<vmem>>, %arg5: memref<1x32x96xbf16, #tpu.memory_space<vmem>>, %arg6: memref<1x1x96xf32, #tpu.memory_space<vmem>>, %arg7: memref<1x32x32xbf16, #tpu.memory_space<vmem>>, %arg8: memref<1x1x32xf32, #tpu.memory_space<vmem>>, %arg9: memref<1x1x32xf32, #tpu.memory_space<vmem>>, %arg10: memref<1x1x32xf32, #tpu.memory_space<vmem>>, %arg11: memref<1x32x128xbf16, #tpu.memory_space<vmem>>, %arg12: memref<1x1x128xf32, #tpu.memory_space<vmem>>, %arg13: memref<1x128x32xbf16, #tpu.memory_space<vmem>>, %arg14: memref<1x1x32xf32, #tpu.memory_space<vmem>>, %arg15: memref<32x32xf32, #tpu.memory_space<vmem>>, %arg16: memref<32x32xf32, #tpu.memory_space<vmem>>) attributes {dimension_semantics = [#tpu.dimension_semantics<parallel>, #tpu.dimension_semantics<arbitrary>], iteration_bounds = array<i64: 1, 2>, scalar_prefetch = 0 : i64, scratch_operands = 1 : i64, tpu.core_type = #tpu.core_type<tc>, window_params = [{transform_indices = @transform_0, window_bounds = array<i64: 32, 32>}, {transform_indices = @transform_1, window_bounds = array<i64: 1, 1, 32>}, {transform_indices = @transform_2, window_bounds = array<i64: 1, 1, 32>}, {transform_indices = @transform_3, window_bounds = array<i64: 1, 32, 96>}, {transform_indices = @transform_4, window_bounds = array<i64: 1, 1, 96>}, {transform_indices = @transform_5, window_bounds = array<i64: 1, 32, 32>}, {transform_indices = @transform_6, window_bounds = array<i64: 1, 1, 32>}, {transform_indices = @transform_7, window_bounds = array<i64: 1, 1, 32>}, {transform_indices = @transform_8, window_bounds = array<i64: 1, 1, 32>}, {transform_indices = @transform_9, window_bounds = array<i64: 1, 32, 128>}, {transform_indices = @transform_10, window_bounds = array<i64: 1, 1, 128>}, {transform_indices = @transform_11, window_bounds = array<i64: 1, 128, 32>}, {transform_indices = @transform_12, window_bounds = array<i64: 1, 1, 32>}, {transform_indices = @transform_13, window_bounds = array<i64: 32, 32>}]} {
    %c0_i32 = arith.constant 0 : i32
    %0 = arith.cmpi eq, %arg1, %c0_i32 : i32
    %1 = arith.extui %0 : i1 to i32
    %c0_i32_0 = arith.constant 0 : i32
    %2 = arith.cmpi ne, %1, %c0_i32_0 : i32
    scf.if %2 {
      %c0_98 = arith.constant 0 : index
      %c0_99 = arith.constant 0 : index
      %278 = vector.load %arg2[%c0_98, %c0_99] : memref<32x32xf32, #tpu.memory_space<vmem>>, vector<32x32xf32>
      %c0_100 = arith.constant 0 : index
      %c0_101 = arith.constant 0 : index
      %279 = vector.load %arg16[%c0_100, %c0_101] : memref<32x32xf32, #tpu.memory_space<vmem>>, vector<32x32xf32>
      tpu.vector_store %arg16[%c0_100, %c0_101], %278 {strides = array<i32>} : memref<32x32xf32, #tpu.memory_space<vmem>>, vector<32x32xf32>,
    } else {
    }
    %c0 = arith.constant 0 : index
    %c0_1 = arith.constant 0 : index
    %3 = vector.load %arg16[%c0, %c0_1] : memref<32x32xf32, #tpu.memory_space<vmem>>, vector<32x32xf32>
    %c0_2 = arith.constant 0 : index
    %c0_3 = arith.constant 0 : index
    %c0_4 = arith.constant 0 : index
    %4 = vector.load %arg3[%c0_2, %c0_3, %c0_4] : memref<1x1x32xf32, #tpu.memory_space<vmem>>, vector<1x1x32xf32>
    %5 = vector.shape_cast %4 : vector<1x1x32xf32> to vector<1x32xf32>
    %c0_5 = arith.constant 0 : index
    %c0_6 = arith.constant 0 : index
    %c0_7 = arith.constant 0 : index
    %6 = vector.load %arg4[%c0_5, %c0_6, %c0_7] : memref<1x1x32xf32, #tpu.memory_space<vmem>>, vector<1x1x32xf32>
    %7 = vector.shape_cast %6 : vector<1x1x32xf32> to vector<1x32xf32>
    %cst = arith.constant dense<0.000000e+00> : vector<32xf32>
    %8 = vector.multi_reduction <add>, %3, %cst [1] : vector<32x32xf32> to vector<32xf32>
    %9 = vector.shape_cast %8 : vector<32xf32> to vector<32x1xf32>
    %cst_8 = arith.constant 3.200000e+01 : f32
    %10 = vector.broadcast %cst_8 : f32 to vector<32x1xf32>
    %11 = arith.divf %9, %10 : vector<32x1xf32>
    %12 = vector.broadcast %11 : vector<32x1xf32> to vector<32x32xf32>
    %13 = arith.subf %3, %12 : vector<32x32xf32>
    %14 = arith.mulf %13, %13 : vector<32x32xf32>
    %cst_9 = arith.constant dense<0.000000e+00> : vector<32xf32>
    %15 = vector.multi_reduction <add>, %14, %cst_9 [1] : vector<32x32xf32> to vector<32xf32>
    %16 = vector.shape_cast %15 : vector<32xf32> to vector<32x1xf32>
    %cst_10 = arith.constant 3.200000e+01 : f32
    %17 = vector.broadcast %cst_10 : f32 to vector<32x1xf32>
    %18 = arith.divf %16, %17 : vector<32x1xf32>
    %19 = vector.broadcast %11 : vector<32x1xf32> to vector<32x32xf32>
    %20 = arith.subf %3, %19 : vector<32x32xf32>
    %cst_11 = arith.constant 9.99999974E-6 : f32
    %21 = vector.broadcast %cst_11 : f32 to vector<32x1xf32>
    %22 = arith.addf %18, %21 : vector<32x1xf32>
    %23 = math.rsqrt %22 : vector<32x1xf32>
    %24 = vector.broadcast %23 : vector<32x1xf32> to vector<32x32xf32>
    %25 = arith.mulf %20, %24 : vector<32x32xf32>
    %26 = vector.broadcast %5 : vector<1x32xf32> to vector<32x32xf32>
    %27 = arith.mulf %25, %26 : vector<32x32xf32>
    %28 = vector.broadcast %7 : vector<1x32xf32> to vector<32x32xf32>
    %29 = arith.addf %27, %28 : vector<32x32xf32>
    %30 = arith.truncf %29 : vector<32x32xf32> to vector<32x32xbf16>
    %c0_12 = arith.constant 0 : index
    %c0_13 = arith.constant 0 : index
    %c0_14 = arith.constant 0 : index
    %31 = vector.load %arg5[%c0_12, %c0_13, %c0_14] : memref<1x32x96xbf16, #tpu.memory_space<vmem>>, vector<1x32x96xbf16>
    %32 = vector.shape_cast %31 : vector<1x32x96xbf16> to vector<32x96xbf16>
    %cst_15 = arith.constant dense<0.000000e+00> : vector<32x96xf32>
    %33 = tpu.matmul %30, %32, %cst_15 {dimension_numbers = #tpu.dot_dimension_numbers<[1], [0], [0], [1], [0, 0, 1, 1], [], []>} : vector<32x32xbf16>, vector<32x96xbf16>, vector<32x96xf32> -> vector<32x96xf32>
    %c0_16 = arith.constant 0 : index
    %c0_17 = arith.constant 0 : index
    %c0_18 = arith.constant 0 : index
    %34 = vector.load %arg6[%c0_16, %c0_17, %c0_18] : memref<1x1x96xf32, #tpu.memory_space<vmem>>, vector<1x1x96xf32>
    %35 = vector.shape_cast %34 : vector<1x1x96xf32> to vector<1x96xf32>
    %36 = vector.broadcast %35 : vector<1x96xf32> to vector<32x96xf32>
    %37 = arith.addf %33, %36 : vector<32x96xf32>
    %38 = vector.extract_strided_slice %37 {offsets = [0, 0], sizes = [16, 8], strides = [1, 1]} : vector<32x96xf32> to vector<16x8xf32>
    %cst_19 = arith.constant 0.353553385 : f32
    %39 = vector.broadcast %cst_19 : f32 to vector<16x8xf32>
    %40 = arith.mulf %38, %39 : vector<16x8xf32>
    %41 = vector.extract_strided_slice %37 {offsets = [0, 32], sizes = [16, 8], strides = [1, 1]} : vector<32x96xf32> to vector<16x8xf32>
    %42 = vector.extract_strided_slice %37 {offsets = [0, 64], sizes = [16, 8], strides = [1, 1]} : vector<32x96xf32> to vector<16x8xf32>
    %43 = arith.truncf %40 : vector<16x8xf32> to vector<16x8xbf16>
    %44 = arith.truncf %41 : vector<16x8xf32> to vector<16x8xbf16>
    %cst_20 = arith.constant dense<0.000000e+00> : vector<16x16xf32>
    %45 = tpu.matmul %43, %44, %cst_20 {dimension_numbers = #tpu.dot_dimension_numbers<[1], [1], [0], [0], [0, 0, 1, 0], [], []>} : vector<16x8xbf16>, vector<16x8xbf16>, vector<16x16xf32> -> vector<16x16xf32>
    %cst_21 = arith.constant dense<0xFF800000> : vector<16xf32>
    %46 = vector.multi_reduction <maximumf>, %45, %cst_21 [1] : vector<16x16xf32> to vector<16xf32>
    %47 = vector.shape_cast %46 : vector<16xf32> to vector<16x1xf32>
    %48 = vector.broadcast %47 : vector<16x1xf32> to vector<16x16xf32>
    %49 = arith.subf %45, %48 : vector<16x16xf32>
    %50 = math.exp %49 : vector<16x16xf32>
    %cst_22 = arith.constant dense<0.000000e+00> : vector<16xf32>
    %51 = vector.multi_reduction <add>, %50, %cst_22 [1] : vector<16x16xf32> to vector<16xf32>
    %52 = vector.shape_cast %51 : vector<16xf32> to vector<16x1xf32>
    %53 = tpu.reciprocal %52 {approx = true} : vector<16x1xf32> -> vector<16x1xf32>
    %54 = vector.broadcast %53 : vector<16x1xf32> to vector<16x16xf32>
    %55 = arith.mulf %50, %54 : vector<16x16xf32>
    %56 = arith.truncf %55 : vector<16x16xf32> to vector<16x16xbf16>
    %57 = arith.truncf %42 : vector<16x8xf32> to vector<16x8xbf16>
    %cst_23 = arith.constant dense<0.000000e+00> : vector<16x8xf32>
    %58 = tpu.matmul %56, %57, %cst_23 {dimension_numbers = #tpu.dot_dimension_numbers<[1], [0], [0], [1], [0, 0, 1, 1], [], []>} : vector<16x16xbf16>, vector<16x8xbf16>, vector<16x8xf32> -> vector<16x8xf32>
    %59 = vector.extract_strided_slice %37 {offsets = [0, 8], sizes = [16, 8], strides = [1, 1]} : vector<32x96xf32> to vector<16x8xf32>
    %cst_24 = arith.constant 0.353553385 : f32
    %60 = vector.broadcast %cst_24 : f32 to vector<16x8xf32>
    %61 = arith.mulf %59, %60 : vector<16x8xf32>
    %62 = vector.extract_strided_slice %37 {offsets = [0, 40], sizes = [16, 8], strides = [1, 1]} : vector<32x96xf32> to vector<16x8xf32>
    %63 = vector.extract_strided_slice %37 {offsets = [0, 72], sizes = [16, 8], strides = [1, 1]} : vector<32x96xf32> to vector<16x8xf32>
    %64 = arith.truncf %61 : vector<16x8xf32> to vector<16x8xbf16>
    %65 = arith.truncf %62 : vector<16x8xf32> to vector<16x8xbf16>
    %cst_25 = arith.constant dense<0.000000e+00> : vector<16x16xf32>
    %66 = tpu.matmul %64, %65, %cst_25 {dimension_numbers = #tpu.dot_dimension_numbers<[1], [1], [0], [0], [0, 0, 1, 0], [], []>} : vector<16x8xbf16>, vector<16x8xbf16>, vector<16x16xf32> -> vector<16x16xf32>
    %cst_26 = arith.constant dense<0xFF800000> : vector<16xf32>
    %67 = vector.multi_reduction <maximumf>, %66, %cst_26 [1] : vector<16x16xf32> to vector<16xf32>
    %68 = vector.shape_cast %67 : vector<16xf32> to vector<16x1xf32>
    %69 = vector.broadcast %68 : vector<16x1xf32> to vector<16x16xf32>
    %70 = arith.subf %66, %69 : vector<16x16xf32>
    %71 = math.exp %70 : vector<16x16xf32>
    %cst_27 = arith.constant dense<0.000000e+00> : vector<16xf32>
    %72 = vector.multi_reduction <add>, %71, %cst_27 [1] : vector<16x16xf32> to vector<16xf32>
    %73 = vector.shape_cast %72 : vector<16xf32> to vector<16x1xf32>
    %74 = tpu.reciprocal %73 {approx = true} : vector<16x1xf32> -> vector<16x1xf32>
    %75 = vector.broadcast %74 : vector<16x1xf32> to vector<16x16xf32>
    %76 = arith.mulf %71, %75 : vector<16x16xf32>
    %77 = arith.truncf %76 : vector<16x16xf32> to vector<16x16xbf16>
    %78 = arith.truncf %63 : vector<16x8xf32> to vector<16x8xbf16>
    %cst_28 = arith.constant dense<0.000000e+00> : vector<16x8xf32>
    %79 = tpu.matmul %77, %78, %cst_28 {dimension_numbers = #tpu.dot_dimension_numbers<[1], [0], [0], [1], [0, 0, 1, 1], [], []>} : vector<16x16xbf16>, vector<16x8xbf16>, vector<16x8xf32> -> vector<16x8xf32>
    %80 = vector.extract_strided_slice %37 {offsets = [0, 16], sizes = [16, 8], strides = [1, 1]} : vector<32x96xf32> to vector<16x8xf32>
    %cst_29 = arith.constant 0.353553385 : f32
    %81 = vector.broadcast %cst_29 : f32 to vector<16x8xf32>
    %82 = arith.mulf %80, %81 : vector<16x8xf32>
    %83 = vector.extract_strided_slice %37 {offsets = [0, 48], sizes = [16, 8], strides = [1, 1]} : vector<32x96xf32> to vector<16x8xf32>
    %84 = vector.extract_strided_slice %37 {offsets = [0, 80], sizes = [16, 8], strides = [1, 1]} : vector<32x96xf32> to vector<16x8xf32>
    %85 = arith.truncf %82 : vector<16x8xf32> to vector<16x8xbf16>
    %86 = arith.truncf %83 : vector<16x8xf32> to vector<16x8xbf16>
    %cst_30 = arith.constant dense<0.000000e+00> : vector<16x16xf32>
    %87 = tpu.matmul %85, %86, %cst_30 {dimension_numbers = #tpu.dot_dimension_numbers<[1], [1], [0], [0], [0, 0, 1, 0], [], []>} : vector<16x8xbf16>, vector<16x8xbf16>, vector<16x16xf32> -> vector<16x16xf32>
    %cst_31 = arith.constant dense<0xFF800000> : vector<16xf32>
    %88 = vector.multi_reduction <maximumf>, %87, %cst_31 [1] : vector<16x16xf32> to vector<16xf32>
    %89 = vector.shape_cast %88 : vector<16xf32> to vector<16x1xf32>
    %90 = vector.broadcast %89 : vector<16x1xf32> to vector<16x16xf32>
    %91 = arith.subf %87, %90 : vector<16x16xf32>
    %92 = math.exp %91 : vector<16x16xf32>
    %cst_32 = arith.constant dense<0.000000e+00> : vector<16xf32>
    %93 = vector.multi_reduction <add>, %92, %cst_32 [1] : vector<16x16xf32> to vector<16xf32>
    %94 = vector.shape_cast %93 : vector<16xf32> to vector<16x1xf32>
    %95 = tpu.reciprocal %94 {approx = true} : vector<16x1xf32> -> vector<16x1xf32>
    %96 = vector.broadcast %95 : vector<16x1xf32> to vector<16x16xf32>
    %97 = arith.mulf %92, %96 : vector<16x16xf32>
    %98 = arith.truncf %97 : vector<16x16xf32> to vector<16x16xbf16>
    %99 = arith.truncf %84 : vector<16x8xf32> to vector<16x8xbf16>
    %cst_33 = arith.constant dense<0.000000e+00> : vector<16x8xf32>
    %100 = tpu.matmul %98, %99, %cst_33 {dimension_numbers = #tpu.dot_dimension_numbers<[1], [0], [0], [1], [0, 0, 1, 1], [], []>} : vector<16x16xbf16>, vector<16x8xbf16>, vector<16x8xf32> -> vector<16x8xf32>
    %101 = vector.extract_strided_slice %37 {offsets = [0, 24], sizes = [16, 8], strides = [1, 1]} : vector<32x96xf32> to vector<16x8xf32>
    %cst_34 = arith.constant 0.353553385 : f32
    %102 = vector.broadcast %cst_34 : f32 to vector<16x8xf32>
    %103 = arith.mulf %101, %102 : vector<16x8xf32>
    %104 = vector.extract_strided_slice %37 {offsets = [0, 56], sizes = [16, 8], strides = [1, 1]} : vector<32x96xf32> to vector<16x8xf32>
    %105 = vector.extract_strided_slice %37 {offsets = [0, 88], sizes = [16, 8], strides = [1, 1]} : vector<32x96xf32> to vector<16x8xf32>
    %106 = arith.truncf %103 : vector<16x8xf32> to vector<16x8xbf16>
    %107 = arith.truncf %104 : vector<16x8xf32> to vector<16x8xbf16>
    %cst_35 = arith.constant dense<0.000000e+00> : vector<16x16xf32>
    %108 = tpu.matmul %106, %107, %cst_35 {dimension_numbers = #tpu.dot_dimension_numbers<[1], [1], [0], [0], [0, 0, 1, 0], [], []>} : vector<16x8xbf16>, vector<16x8xbf16>, vector<16x16xf32> -> vector<16x16xf32>
    %cst_36 = arith.constant dense<0xFF800000> : vector<16xf32>
    %109 = vector.multi_reduction <maximumf>, %108, %cst_36 [1] : vector<16x16xf32> to vector<16xf32>
    %110 = vector.shape_cast %109 : vector<16xf32> to vector<16x1xf32>
    %111 = vector.broadcast %110 : vector<16x1xf32> to vector<16x16xf32>
    %112 = arith.subf %108, %111 : vector<16x16xf32>
    %113 = math.exp %112 : vector<16x16xf32>
    %cst_37 = arith.constant dense<0.000000e+00> : vector<16xf32>
    %114 = vector.multi_reduction <add>, %113, %cst_37 [1] : vector<16x16xf32> to vector<16xf32>
    %115 = vector.shape_cast %114 : vector<16xf32> to vector<16x1xf32>
    %116 = tpu.reciprocal %115 {approx = true} : vector<16x1xf32> -> vector<16x1xf32>
    %117 = vector.broadcast %116 : vector<16x1xf32> to vector<16x16xf32>
    %118 = arith.mulf %113, %117 : vector<16x16xf32>
    %119 = arith.truncf %118 : vector<16x16xf32> to vector<16x16xbf16>
    %120 = arith.truncf %105 : vector<16x8xf32> to vector<16x8xbf16>
    %cst_38 = arith.constant dense<0.000000e+00> : vector<16x8xf32>
    %121 = tpu.matmul %119, %120, %cst_38 {dimension_numbers = #tpu.dot_dimension_numbers<[1], [0], [0], [1], [0, 0, 1, 1], [], []>} : vector<16x16xbf16>, vector<16x8xbf16>, vector<16x8xf32> -> vector<16x8xf32>
    %122 = tpu.concatenate %58, %79, %100, %121 in 1 : vector<16x8xf32>, vector<16x8xf32>, vector<16x8xf32>, vector<16x8xf32> -> vector<16x32xf32>
    %123 = vector.extract_strided_slice %37 {offsets = [16, 0], sizes = [16, 8], strides = [1, 1]} : vector<32x96xf32> to vector<16x8xf32>
    %cst_39 = arith.constant 0.353553385 : f32
    %124 = vector.broadcast %cst_39 : f32 to vector<16x8xf32>
    %125 = arith.mulf %123, %124 : vector<16x8xf32>
    %126 = vector.extract_strided_slice %37 {offsets = [16, 32], sizes = [16, 8], strides = [1, 1]} : vector<32x96xf32> to vector<16x8xf32>
    %127 = vector.extract_strided_slice %37 {offsets = [16, 64], sizes = [16, 8], strides = [1, 1]} : vector<32x96xf32> to vector<16x8xf32>
    %128 = arith.truncf %125 : vector<16x8xf32> to vector<16x8xbf16>
    %129 = arith.truncf %126 : vector<16x8xf32> to vector<16x8xbf16>
    %cst_40 = arith.constant dense<0.000000e+00> : vector<16x16xf32>
    %130 = tpu.matmul %128, %129, %cst_40 {dimension_numbers = #tpu.dot_dimension_numbers<[1], [1], [0], [0], [0, 0, 1, 0], [], []>} : vector<16x8xbf16>, vector<16x8xbf16>, vector<16x16xf32> -> vector<16x16xf32>
    %cst_41 = arith.constant dense<0xFF800000> : vector<16xf32>
    %131 = vector.multi_reduction <maximumf>, %130, %cst_41 [1] : vector<16x16xf32> to vector<16xf32>
    %132 = vector.shape_cast %131 : vector<16xf32> to vector<16x1xf32>
    %133 = vector.broadcast %132 : vector<16x1xf32> to vector<16x16xf32>
    %134 = arith.subf %130, %133 : vector<16x16xf32>
    %135 = math.exp %134 : vector<16x16xf32>
    %cst_42 = arith.constant dense<0.000000e+00> : vector<16xf32>
    %136 = vector.multi_reduction <add>, %135, %cst_42 [1] : vector<16x16xf32> to vector<16xf32>
    %137 = vector.shape_cast %136 : vector<16xf32> to vector<16x1xf32>
    %138 = tpu.reciprocal %137 {approx = true} : vector<16x1xf32> -> vector<16x1xf32>
    %139 = vector.broadcast %138 : vector<16x1xf32> to vector<16x16xf32>
    %140 = arith.mulf %135, %139 : vector<16x16xf32>
    %141 = arith.truncf %140 : vector<16x16xf32> to vector<16x16xbf16>
    %142 = arith.truncf %127 : vector<16x8xf32> to vector<16x8xbf16>
    %cst_43 = arith.constant dense<0.000000e+00> : vector<16x8xf32>
    %143 = tpu.matmul %141, %142, %cst_43 {dimension_numbers = #tpu.dot_dimension_numbers<[1], [0], [0], [1], [0, 0, 1, 1], [], []>} : vector<16x16xbf16>, vector<16x8xbf16>, vector<16x8xf32> -> vector<16x8xf32>
    %144 = vector.extract_strided_slice %37 {offsets = [16, 8], sizes = [16, 8], strides = [1, 1]} : vector<32x96xf32> to vector<16x8xf32>
    %cst_44 = arith.constant 0.353553385 : f32
    %145 = vector.broadcast %cst_44 : f32 to vector<16x8xf32>
    %146 = arith.mulf %144, %145 : vector<16x8xf32>
    %147 = vector.extract_strided_slice %37 {offsets = [16, 40], sizes = [16, 8], strides = [1, 1]} : vector<32x96xf32> to vector<16x8xf32>
    %148 = vector.extract_strided_slice %37 {offsets = [16, 72], sizes = [16, 8], strides = [1, 1]} : vector<32x96xf32> to vector<16x8xf32>
    %149 = arith.truncf %146 : vector<16x8xf32> to vector<16x8xbf16>
    %150 = arith.truncf %147 : vector<16x8xf32> to vector<16x8xbf16>
    %cst_45 = arith.constant dense<0.000000e+00> : vector<16x16xf32>
    %151 = tpu.matmul %149, %150, %cst_45 {dimension_numbers = #tpu.dot_dimension_numbers<[1], [1], [0], [0], [0, 0, 1, 0], [], []>} : vector<16x8xbf16>, vector<16x8xbf16>, vector<16x16xf32> -> vector<16x16xf32>
    %cst_46 = arith.constant dense<0xFF800000> : vector<16xf32>
    %152 = vector.multi_reduction <maximumf>, %151, %cst_46 [1] : vector<16x16xf32> to vector<16xf32>
    %153 = vector.shape_cast %152 : vector<16xf32> to vector<16x1xf32>
    %154 = vector.broadcast %153 : vector<16x1xf32> to vector<16x16xf32>
    %155 = arith.subf %151, %154 : vector<16x16xf32>
    %156 = math.exp %155 : vector<16x16xf32>
    %cst_47 = arith.constant dense<0.000000e+00> : vector<16xf32>
    %157 = vector.multi_reduction <add>, %156, %cst_47 [1] : vector<16x16xf32> to vector<16xf32>
    %158 = vector.shape_cast %157 : vector<16xf32> to vector<16x1xf32>
    %159 = tpu.reciprocal %158 {approx = true} : vector<16x1xf32> -> vector<16x1xf32>
    %160 = vector.broadcast %159 : vector<16x1xf32> to vector<16x16xf32>
    %161 = arith.mulf %156, %160 : vector<16x16xf32>
    %162 = arith.truncf %161 : vector<16x16xf32> to vector<16x16xbf16>
    %163 = arith.truncf %148 : vector<16x8xf32> to vector<16x8xbf16>
    %cst_48 = arith.constant dense<0.000000e+00> : vector<16x8xf32>
    %164 = tpu.matmul %162, %163, %cst_48 {dimension_numbers = #tpu.dot_dimension_numbers<[1], [0], [0], [1], [0, 0, 1, 1], [], []>} : vector<16x16xbf16>, vector<16x8xbf16>, vector<16x8xf32> -> vector<16x8xf32>
    %165 = vector.extract_strided_slice %37 {offsets = [16, 16], sizes = [16, 8], strides = [1, 1]} : vector<32x96xf32> to vector<16x8xf32>
    %cst_49 = arith.constant 0.353553385 : f32
    %166 = vector.broadcast %cst_49 : f32 to vector<16x8xf32>
    %167 = arith.mulf %165, %166 : vector<16x8xf32>
    %168 = vector.extract_strided_slice %37 {offsets = [16, 48], sizes = [16, 8], strides = [1, 1]} : vector<32x96xf32> to vector<16x8xf32>
    %169 = vector.extract_strided_slice %37 {offsets = [16, 80], sizes = [16, 8], strides = [1, 1]} : vector<32x96xf32> to vector<16x8xf32>
    %170 = arith.truncf %167 : vector<16x8xf32> to vector<16x8xbf16>
    %171 = arith.truncf %168 : vector<16x8xf32> to vector<16x8xbf16>
    %cst_50 = arith.constant dense<0.000000e+00> : vector<16x16xf32>
    %172 = tpu.matmul %170, %171, %cst_50 {dimension_numbers = #tpu.dot_dimension_numbers<[1], [1], [0], [0], [0, 0, 1, 0], [], []>} : vector<16x8xbf16>, vector<16x8xbf16>, vector<16x16xf32> -> vector<16x16xf32>
    %cst_51 = arith.constant dense<0xFF800000> : vector<16xf32>
    %173 = vector.multi_reduction <maximumf>, %172, %cst_51 [1] : vector<16x16xf32> to vector<16xf32>
    %174 = vector.shape_cast %173 : vector<16xf32> to vector<16x1xf32>
    %175 = vector.broadcast %174 : vector<16x1xf32> to vector<16x16xf32>
    %176 = arith.subf %172, %175 : vector<16x16xf32>
    %177 = math.exp %176 : vector<16x16xf32>
    %cst_52 = arith.constant dense<0.000000e+00> : vector<16xf32>
    %178 = vector.multi_reduction <add>, %177, %cst_52 [1] : vector<16x16xf32> to vector<16xf32>
    %179 = vector.shape_cast %178 : vector<16xf32> to vector<16x1xf32>
    %180 = tpu.reciprocal %179 {approx = true} : vector<16x1xf32> -> vector<16x1xf32>
    %181 = vector.broadcast %180 : vector<16x1xf32> to vector<16x16xf32>
    %182 = arith.mulf %177, %181 : vector<16x16xf32>
    %183 = arith.truncf %182 : vector<16x16xf32> to vector<16x16xbf16>
    %184 = arith.truncf %169 : vector<16x8xf32> to vector<16x8xbf16>
    %cst_53 = arith.constant dense<0.000000e+00> : vector<16x8xf32>
    %185 = tpu.matmul %183, %184, %cst_53 {dimension_numbers = #tpu.dot_dimension_numbers<[1], [0], [0], [1], [0, 0, 1, 1], [], []>} : vector<16x16xbf16>, vector<16x8xbf16>, vector<16x8xf32> -> vector<16x8xf32>
    %186 = vector.extract_strided_slice %37 {offsets = [16, 24], sizes = [16, 8], strides = [1, 1]} : vector<32x96xf32> to vector<16x8xf32>
    %cst_54 = arith.constant 0.353553385 : f32
    %187 = vector.broadcast %cst_54 : f32 to vector<16x8xf32>
    %188 = arith.mulf %186, %187 : vector<16x8xf32>
    %189 = vector.extract_strided_slice %37 {offsets = [16, 56], sizes = [16, 8], strides = [1, 1]} : vector<32x96xf32> to vector<16x8xf32>
    %190 = vector.extract_strided_slice %37 {offsets = [16, 88], sizes = [16, 8], strides = [1, 1]} : vector<32x96xf32> to vector<16x8xf32>
    %191 = arith.truncf %188 : vector<16x8xf32> to vector<16x8xbf16>
    %192 = arith.truncf %189 : vector<16x8xf32> to vector<16x8xbf16>
    %cst_55 = arith.constant dense<0.000000e+00> : vector<16x16xf32>
    %193 = tpu.matmul %191, %192, %cst_55 {dimension_numbers = #tpu.dot_dimension_numbers<[1], [1], [0], [0], [0, 0, 1, 0], [], []>} : vector<16x8xbf16>, vector<16x8xbf16>, vector<16x16xf32> -> vector<16x16xf32>
    %cst_56 = arith.constant dense<0xFF800000> : vector<16xf32>
    %194 = vector.multi_reduction <maximumf>, %193, %cst_56 [1] : vector<16x16xf32> to vector<16xf32>
    %195 = vector.shape_cast %194 : vector<16xf32> to vector<16x1xf32>
    %196 = vector.broadcast %195 : vector<16x1xf32> to vector<16x16xf32>
    %197 = arith.subf %193, %196 : vector<16x16xf32>
    %198 = math.exp %197 : vector<16x16xf32>
    %cst_57 = arith.constant dense<0.000000e+00> : vector<16xf32>
    %199 = vector.multi_reduction <add>, %198, %cst_57 [1] : vector<16x16xf32> to vector<16xf32>
    %200 = vector.shape_cast %199 : vector<16xf32> to vector<16x1xf32>
    %201 = tpu.reciprocal %200 {approx = true} : vector<16x1xf32> -> vector<16x1xf32>
    %202 = vector.broadcast %201 : vector<16x1xf32> to vector<16x16xf32>
    %203 = arith.mulf %198, %202 : vector<16x16xf32>
    %204 = arith.truncf %203 : vector<16x16xf32> to vector<16x16xbf16>
    %205 = arith.truncf %190 : vector<16x8xf32> to vector<16x8xbf16>
    %cst_58 = arith.constant dense<0.000000e+00> : vector<16x8xf32>
    %206 = tpu.matmul %204, %205, %cst_58 {dimension_numbers = #tpu.dot_dimension_numbers<[1], [0], [0], [1], [0, 0, 1, 1], [], []>} : vector<16x16xbf16>, vector<16x8xbf16>, vector<16x8xf32> -> vector<16x8xf32>
    %207 = tpu.concatenate %143, %164, %185, %206 in 1 : vector<16x8xf32>, vector<16x8xf32>, vector<16x8xf32>, vector<16x8xf32> -> vector<16x32xf32>
    %208 = tpu.concatenate %122, %207 in 0 : vector<16x32xf32>, vector<16x32xf32> -> vector<32x32xf32>
    %209 = arith.truncf %208 : vector<32x32xf32> to vector<32x32xbf16>
    %c0_59 = arith.constant 0 : index
    %c0_60 = arith.constant 0 : index
    %c0_61 = arith.constant 0 : index
    %210 = vector.load %arg7[%c0_59, %c0_60, %c0_61] : memref<1x32x32xbf16, #tpu.memory_space<vmem>>, vector<1x32x32xbf16>
    %211 = vector.shape_cast %210 : vector<1x32x32xbf16> to vector<32x32xbf16>
    %cst_62 = arith.constant dense<0.000000e+00> : vector<32x32xf32>
    %212 = tpu.matmul %209, %211, %cst_62 {dimension_numbers = #tpu.dot_dimension_numbers<[1], [0], [0], [1], [0, 0, 1, 1], [], []>} : vector<32x32xbf16>, vector<32x32xbf16>, vector<32x32xf32> -> vector<32x32xf32>
    %213 = arith.addf %3, %212 : vector<32x32xf32>
    %c0_63 = arith.constant 0 : index
    %c0_64 = arith.constant 0 : index
    %c0_65 = arith.constant 0 : index
    %214 = vector.load %arg8[%c0_63, %c0_64, %c0_65] : memref<1x1x32xf32, #tpu.memory_space<vmem>>, vector<1x1x32xf32>
    %215 = vector.shape_cast %214 : vector<1x1x32xf32> to vector<1x32xf32>
    %216 = vector.broadcast %215 : vector<1x32xf32> to vector<32x32xf32>
    %217 = arith.addf %213, %216 : vector<32x32xf32>
    %c0_66 = arith.constant 0 : index
    %c0_67 = arith.constant 0 : index
    %c0_68 = arith.constant 0 : index
    %218 = vector.load %arg9[%c0_66, %c0_67, %c0_68] : memref<1x1x32xf32, #tpu.memory_space<vmem>>, vector<1x1x32xf32>
    %219 = vector.shape_cast %218 : vector<1x1x32xf32> to vector<1x32xf32>
    %c0_69 = arith.constant 0 : index
    %c0_70 = arith.constant 0 : index
    %c0_71 = arith.constant 0 : index
    %220 = vector.load %arg10[%c0_69, %c0_70, %c0_71] : memref<1x1x32xf32, #tpu.memory_space<vmem>>, vector<1x1x32xf32>
    %221 = vector.shape_cast %220 : vector<1x1x32xf32> to vector<1x32xf32>
    %cst_72 = arith.constant dense<0.000000e+00> : vector<32xf32>
    %222 = vector.multi_reduction <add>, %217, %cst_72 [1] : vector<32x32xf32> to vector<32xf32>
    %223 = vector.shape_cast %222 : vector<32xf32> to vector<32x1xf32>
    %cst_73 = arith.constant 3.200000e+01 : f32
    %224 = vector.broadcast %cst_73 : f32 to vector<32x1xf32>
    %225 = arith.divf %223, %224 : vector<32x1xf32>
    %226 = vector.broadcast %225 : vector<32x1xf32> to vector<32x32xf32>
    %227 = arith.subf %217, %226 : vector<32x32xf32>
    %228 = arith.mulf %227, %227 : vector<32x32xf32>
    %cst_74 = arith.constant dense<0.000000e+00> : vector<32xf32>
    %229 = vector.multi_reduction <add>, %228, %cst_74 [1] : vector<32x32xf32> to vector<32xf32>
    %230 = vector.shape_cast %229 : vector<32xf32> to vector<32x1xf32>
    %cst_75 = arith.constant 3.200000e+01 : f32
    %231 = vector.broadcast %cst_75 : f32 to vector<32x1xf32>
    %232 = arith.divf %230, %231 : vector<32x1xf32>
    %233 = vector.broadcast %225 : vector<32x1xf32> to vector<32x32xf32>
    %234 = arith.subf %217, %233 : vector<32x32xf32>
    %cst_76 = arith.constant 9.99999974E-6 : f32
    %235 = vector.broadcast %cst_76 : f32 to vector<32x1xf32>
    %236 = arith.addf %232, %235 : vector<32x1xf32>
    %237 = math.rsqrt %236 : vector<32x1xf32>
    %238 = vector.broadcast %237 : vector<32x1xf32> to vector<32x32xf32>
    %239 = arith.mulf %234, %238 : vector<32x32xf32>
    %240 = vector.broadcast %219 : vector<1x32xf32> to vector<32x32xf32>
    %241 = arith.mulf %239, %240 : vector<32x32xf32>
    %242 = vector.broadcast %221 : vector<1x32xf32> to vector<32x32xf32>
    %243 = arith.addf %241, %242 : vector<32x32xf32>
    %244 = arith.truncf %243 : vector<32x32xf32> to vector<32x32xbf16>
    %c0_77 = arith.constant 0 : index
    %c0_78 = arith.constant 0 : index
    %c0_79 = arith.constant 0 : index
    %245 = vector.load %arg11[%c0_77, %c0_78, %c0_79] : memref<1x32x128xbf16, #tpu.memory_space<vmem>>, vector<1x32x128xbf16>
    %246 = vector.shape_cast %245 : vector<1x32x128xbf16> to vector<32x128xbf16>
    %cst_80 = arith.constant dense<0.000000e+00> : vector<32x128xf32>
    %247 = tpu.matmul %244, %246, %cst_80 {dimension_numbers = #tpu.dot_dimension_numbers<[1], [0], [0], [1], [0, 0, 1, 1], [], []>} : vector<32x32xbf16>, vector<32x128xbf16>, vector<32x128xf32> -> vector<32x128xf32>
    %c0_81 = arith.constant 0 : index
    %c0_82 = arith.constant 0 : index
    %c0_83 = arith.constant 0 : index
    %248 = vector.load %arg12[%c0_81, %c0_82, %c0_83] : memref<1x1x128xf32, #tpu.memory_space<vmem>>, vector<1x1x128xf32>
    %249 = vector.shape_cast %248 : vector<1x1x128xf32> to vector<1x128xf32>
    %250 = vector.broadcast %249 : vector<1x128xf32> to vector<32x128xf32>
    %251 = arith.addf %247, %250 : vector<32x128xf32>
    %cst_84 = arith.constant 5.000000e-01 : f32
    %252 = vector.broadcast %cst_84 : f32 to vector<32x128xf32>
    %253 = arith.mulf %252, %251 : vector<32x128xf32>
    %cst_85 = arith.constant 4.471500e-02 : f32
    %254 = vector.broadcast %cst_85 : f32 to vector<32x128xf32>
    %255 = arith.mulf %254, %251 : vector<32x128xf32>
    %256 = arith.mulf %255, %251 : vector<32x128xf32>
    %257 = arith.mulf %256, %251 : vector<32x128xf32>
    %258 = arith.addf %251, %257 : vector<32x128xf32>
    %cst_86 = arith.constant 0.797884583 : f32
    %259 = vector.broadcast %cst_86 : f32 to vector<32x128xf32>
    %260 = arith.mulf %259, %258 : vector<32x128xf32>
    %261 = math.tanh %260 : vector<32x128xf32>
    %cst_87 = arith.constant 1.000000e+00 : f32
    %262 = vector.broadcast %cst_87 : f32 to vector<32x128xf32>
    %263 = arith.addf %262, %261 : vector<32x128xf32>
    %264 = arith.mulf %253, %263 : vector<32x128xf32>
    %265 = arith.truncf %264 : vector<32x128xf32> to vector<32x128xbf16>
    %c0_88 = arith.constant 0 : index
    %c0_89 = arith.constant 0 : index
    %c0_90 = arith.constant 0 : index
    %266 = vector.load %arg13[%c0_88, %c0_89, %c0_90] : memref<1x128x32xbf16, #tpu.memory_space<vmem>>, vector<1x128x32xbf16>
    %267 = vector.shape_cast %266 : vector<1x128x32xbf16> to vector<128x32xbf16>
    %cst_91 = arith.constant dense<0.000000e+00> : vector<32x32xf32>
    %268 = tpu.matmul %265, %267, %cst_91 {dimension_numbers = #tpu.dot_dimension_numbers<[1], [0], [0], [1], [0, 0, 1, 1], [], []>} : vector<32x128xbf16>, vector<128x32xbf16>, vector<32x32xf32> -> vector<32x32xf32>
    %269 = arith.addf %217, %268 : vector<32x32xf32>
    %c0_92 = arith.constant 0 : index
    %c0_93 = arith.constant 0 : index
    %c0_94 = arith.constant 0 : index
    %270 = vector.load %arg14[%c0_92, %c0_93, %c0_94] : memref<1x1x32xf32, #tpu.memory_space<vmem>>, vector<1x1x32xf32>
    %271 = vector.shape_cast %270 : vector<1x1x32xf32> to vector<1x32xf32>
    %272 = vector.broadcast %271 : vector<1x32xf32> to vector<32x32xf32>
    %273 = arith.addf %269, %272 : vector<32x32xf32>
    %c0_95 = arith.constant 0 : index
    %c0_96 = arith.constant 0 : index
    %274 = vector.load %arg16[%c0_95, %c0_96] : memref<32x32xf32, #tpu.memory_space<vmem>>, vector<32x32xf32>
    tpu.vector_store %arg16[%c0_95, %c0_96], %273 {strides = array<i32>} : memref<32x32xf32, #tpu.memory_space<vmem>>, vector<32x32xf32>,
    %c1_i32 = arith.constant 1 : i32
    %275 = arith.cmpi eq, %arg1, %c1_i32 : i32
    %276 = arith.extui %275 : i1 to i32
    %c0_i32_97 = arith.constant 0 : i32
    %277 = arith.cmpi ne, %276, %c0_i32_97 : i32
    scf.if %277 {
      %c0_98 = arith.constant 0 : index
      %c0_99 = arith.constant 0 : index
      %278 = vector.load %arg15[%c0_98, %c0_99] : memref<32x32xf32, #tpu.memory_space<vmem>>, vector<32x32xf32>
      tpu.vector_store %arg15[%c0_98, %c0_99], %273 {strides = array<i32>} : memref<32x32xf32, #tpu.memory_space<vmem>>, vector<32x32xf32>,
    } else {
    }
    return
  }
  func.func @transform_0(%arg0: i32, %arg1: i32) -> (i32, i32) {
    %c0_i32 = arith.constant 0 : i32
    %c0_i32_0 = arith.constant 0 : i32
    return %arg0, %c0_i32 : i32, i32
  }
  func.func @transform_1(%arg0: i32, %arg1: i32) -> (i32, i32, i32) {
    %c0_i32 = arith.constant 0 : i32
    %c0_i32_0 = arith.constant 0 : i32
    %c0_i32_1 = arith.constant 0 : i32
    return %arg1, %c0_i32, %c0_i32_0 : i32, i32, i32
  }
  func.func @transform_2(%arg0: i32, %arg1: i32) -> (i32, i32, i32) {
    %c0_i32 = arith.constant 0 : i32
    %c0_i32_0 = arith.constant 0 : i32
    %c0_i32_1 = arith.constant 0 : i32
    return %arg1, %c0_i32, %c0_i32_0 : i32, i32, i32
  }
  func.func @transform_3(%arg0: i32, %arg1: i32) -> (i32, i32, i32) {
    %c0_i32 = arith.constant 0 : i32
    %c0_i32_0 = arith.constant 0 : i32
    %c0_i32_1 = arith.constant 0 : i32
    return %arg1, %c0_i32, %c0_i32_0 : i32, i32, i32
  }
  func.func @transform_4(%arg0: i32, %arg1: i32) -> (i32, i32, i32) {
    %c0_i32 = arith.constant 0 : i32
    %c0_i32_0 = arith.constant 0 : i32
    %c0_i32_1 = arith.constant 0 : i32
    return %arg1, %c0_i32, %c0_i32_0 : i32, i32, i32
  }
  func.func @transform_5(%arg0: i32, %arg1: i32) -> (i32, i32, i32) {
    %c0_i32 = arith.constant 0 : i32
    %c0_i32_0 = arith.constant 0 : i32
    %c0_i32_1 = arith.constant 0 : i32
    return %arg1, %c0_i32, %c0_i32_0 : i32, i32, i32
  }
  func.func @transform_6(%arg0: i32, %arg1: i32) -> (i32, i32, i32) {
    %c0_i32 = arith.constant 0 : i32
    %c0_i32_0 = arith.constant 0 : i32
    %c0_i32_1 = arith.constant 0 : i32
    return %arg1, %c0_i32, %c0_i32_0 : i32, i32, i32
  }
  func.func @transform_7(%arg0: i32, %arg1: i32) -> (i32, i32, i32) {
    %c0_i32 = arith.constant 0 : i32
    %c0_i32_0 = arith.constant 0 : i32
    %c0_i32_1 = arith.constant 0 : i32
    return %arg1, %c0_i32, %c0_i32_0 : i32, i32, i32
  }
  func.func @transform_8(%arg0: i32, %arg1: i32) -> (i32, i32, i32) {
    %c0_i32 = arith.constant 0 : i32
    %c0_i32_0 = arith.constant 0 : i32
    %c0_i32_1 = arith.constant 0 : i32
    return %arg1, %c0_i32, %c0_i32_0 : i32, i32, i32
  }
  func.func @transform_9(%arg0: i32, %arg1: i32) -> (i32, i32, i32) {
    %c0_i32 = arith.constant 0 : i32
    %c0_i32_0 = arith.constant 0 : i32
    %c0_i32_1 = arith.constant 0 : i32
    return %arg1, %c0_i32, %c0_i32_0 : i32, i32, i32
  }
  func.func @transform_10(%arg0: i32, %arg1: i32) -> (i32, i32, i32) {
    %c0_i32 = arith.constant 0 : i32
    %c0_i32_0 = arith.constant 0 : i32
    %c0_i32_1 = arith.constant 0 : i32
    return %arg1, %c0_i32, %c0_i32_0 : i32, i32, i32
  }
  func.func @transform_11(%arg0: i32, %arg1: i32) -> (i32, i32, i32) {
    %c0_i32 = arith.constant 0 : i32
    %c0_i32_0 = arith.constant 0 : i32
    %c0_i32_1 = arith.constant 0 : i32
    return %arg1, %c0_i32, %c0_i32_0 : i32, i32, i32
  }
  func.func @transform_12(%arg0: i32, %arg1: i32) -> (i32, i32, i32) {
    %c0_i32 = arith.constant 0 : i32
    %c0_i32_0 = arith.constant 0 : i32
    %c0_i32_1 = arith.constant 0 : i32
    return %arg1, %c0_i32, %c0_i32_0 : i32, i32, i32
  }
  func.func @transform_13(%arg0: i32, %arg1: i32) -> (i32, i32) {
    %c0_i32 = arith.constant 0 : i32
    %c0_i32_0 = arith.constant 0 : i32
    return %arg0, %c0_i32 : i32, i32
  }
}

</mosaic_0001>

<llo_original>
// kernel: _lambda_.5
$region0: #{_lambda_.5}
  #allocation0 [shape = 'u32[]', space=smem, size = 0x4, offset = 0x4, fixed_abs, tag = 'smem constant byte address 0x4 - core index']
  #allocation1 [shape = 'u32[72,128]{1,0:T(1,128)}', space=vmem, size = 0x9000, scoped, tag = 'internal scratch']
  %s0 = inlined_call_operand.vmem [shape: f32[32,32], index: 0, kind: input, shape index: {}]
  %s1 = inlined_call_operand.vmem [shape: f32[1,32], index: 1, kind: input, shape index: {}]
  %s2 = inlined_call_operand.vmem [shape: f32[1,32], index: 2, kind: input, shape index: {}]
  %s3 = inlined_call_operand.vmem [shape: bf16[32,128], index: 3, kind: input, shape index: {}]
  %s4 = inlined_call_operand.vmem [shape: f32[1,128], index: 4, kind: input, shape index: {}]
  %s5 = inlined_call_operand.vmem [shape: f32[32,128], index: 5, kind: output, shape index: {}]
  %s6 = sld [smem:[#allocation0]]
  $region30: #{_lambda_.5} parent=0
    _
  %s8 = ssub.s32 1, %s6
  %s9 = scalar_select 0, %s8, %s6
  // Predicated region
  $region2: #{_lambda_.5} parent=0 // pred_check
    _
  $region3: #{_lambda_.5} parent=0 // pred_check_branch
    %11 = sbr.rel (0) target = $region5
  $region4: #{_lambda_.5} parent=0 // pred_region
    _
  $region5: #{_lambda_.5} parent=0 // pred_fallthru
    _
  // Predicated region
  $region6: #{_lambda_.5} parent=0 // pred_check
    _
  $region7: #{_lambda_.5} parent=0 // pred_check_branch
    %13 = sbr.rel (0) target = $region9
  $region8: #{_lambda_.5} parent=0 // pred_region
    _
  $region9: #{_lambda_.5} parent=0 // pred_fallthru
    _
  // Predicated region
  $region10: #{_lambda_.5} parent=0 // pred_check
    _
  $region11: #{_lambda_.5} parent=0 // pred_check_branch
    %15 = sbr.rel (0) target = $region13
  $region12: #{_lambda_.5} parent=0 // pred_region
    _
  $region13: #{_lambda_.5} parent=0 // pred_fallthru
    _
  // Predicated region
  $region14: #{_lambda_.5} parent=0 // pred_check
    _
  $region15: #{_lambda_.5} parent=0 // pred_check_branch
    %17 = sbr.rel (0) target = $region17
  $region16: #{_lambda_.5} parent=0 // pred_region
    _
  $region17: #{_lambda_.5} parent=0 // pred_fallthru
    _
  // Predicated region
  $region18: #{_lambda_.5} parent=0 // pred_check
    _
  $region19: #{_lambda_.5} parent=0 // pred_check_branch
    %19 = sbr.rel (0) target = $region21
  $region20: #{_lambda_.5} parent=0 // pred_region
    _
  $region21: #{_lambda_.5} parent=0 // pred_fallthru
    _
  %v21 = vld [vmem:[%s0] sm:$0xff]
  %v22 = vld [vmem:[%s0 + $0x8] sm:$0xff]
  %v23 = vld [vmem:[%s0 + $0x10] sm:$0xff]
  %v24 = vld [vmem:[%s0 + $0x18] sm:$0xff]
  %v25 = vld [vmem:[%s1] sm:$0x1]
  %v26 = vld [vmem:[%s2] sm:$0x1]
  %vm27 = vcmask 261120
  %v28 = vsel %vm27, %v21, 0.0
  %29 = vadd.xlane.f32.xlu0 %v28
  %v30 = vpop.xlane.xlu0 %29
  %v31 = vsel %vm27, %v22, 0.0
  %32 = vadd.xlane.f32.xlu0 %v31
  %v33 = vpop.xlane.xlu0 %32
  %v34 = vsel %vm27, %v23, 0.0
  %35 = vadd.xlane.f32.xlu0 %v34
  %v36 = vpop.xlane.xlu0 %35
  %v37 = vsel %vm27, %v24, 0.0
  %38 = vadd.xlane.f32.xlu0 %v37
  %v39 = vpop.xlane.xlu0 %38
  %v40 = vrcp.pop 32.0
  %v41 = vmul.f32 32.0, %v40
  %v42 = vsub.f32 1.0, %v41
  %v43 = vmul.f32 %v40, %v42
  %v44 = vadd.f32 %v40, %v43
  %vm45 = vweird.f32 %v40
  %v46 = vsel %vm45, %v40, %v44
  %v47 = vmul.f32 %v30, %v46
  %v48 = vmul.f32 %v33, %v46
  %v49 = vmul.f32 %v36, %v46
  %v50 = vmul.f32 %v39, %v46
  %v51 = vsub.f32 %v21, %v47
  %v52 = vsub.f32 %v22, %v48
  %v53 = vsub.f32 %v23, %v49
  %v54 = vsub.f32 %v24, %v50
  %v55 = vmul.f32 %v51, %v51
  %v56 = vmul.f32 %v52, %v52
  %v57 = vmul.f32 %v53, %v53
  %v58 = vmul.f32 %v54, %v54
  %v59 = vsel %vm27, %v55, 0.0
  %60 = vadd.xlane.f32.xlu0 %v59
  %v61 = vpop.xlane.xlu0 %60
  %v62 = vsel %vm27, %v56, 0.0
  %63 = vadd.xlane.f32.xlu0 %v62
  %v64 = vpop.xlane.xlu0 %63
  %v65 = vsel %vm27, %v57, 0.0
  %66 = vadd.xlane.f32.xlu0 %v65
  %v67 = vpop.xlane.xlu0 %66
  %v68 = vsel %vm27, %v58, 0.0
  %69 = vadd.xlane.f32.xlu0 %v68
  %v70 = vpop.xlane.xlu0 %69
  %v71 = vmul.f32 %v61, %v46
  %v72 = vmul.f32 %v64, %v46
  %v73 = vmul.f32 %v67, %v46
  %v74 = vmul.f32 %v70, %v46
  %v75 = vadd.f32 %v71, 1e-05
  %v76 = vadd.f32 %v72, 1e-05
  %v77 = vadd.f32 %v73, 1e-05
  %v78 = vadd.f32 %v74, 1e-05
  %v79 = vrsqrt.pop %v75
  %v80 = vmul.f32 %v79, %v75
  %v81 = vmul.f32 %v80, %v79
  %v82 = vmul.f32 0.5, %v81
  %v83 = vsub.f32 1.5, %v82
  %v84 = vmul.f32 %v79, %v83
  %vm85 = vweird.f32 %v75
  %vm86 = vweird.f32 %v79
  %vm87 = vmor %vm85, %vm86
  %v88 = vsel %vm87, %v79, %v84
  %v89 = vrsqrt.pop %v76
  %v90 = vmul.f32 %v89, %v76
  %v91 = vmul.f32 %v90, %v89
  %v92 = vmul.f32 0.5, %v91
  %v93 = vsub.f32 1.5, %v92
  %v94 = vmul.f32 %v89, %v93
  %vm95 = vweird.f32 %v76
  %vm96 = vweird.f32 %v89
  %vm97 = vmor %vm95, %vm96
  %v98 = vsel %vm97, %v89, %v94
  %v99 = vrsqrt.pop %v77
  %v100 = vmul.f32 %v99, %v77
  %v101 = vmul.f32 %v100, %v99
  %v102 = vmul.f32 0.5, %v101
  %v103 = vsub.f32 1.5, %v102
  %v104 = vmul.f32 %v99, %v103
  %vm105 = vweird.f32 %v77
  %vm106 = vweird.f32 %v99
  %vm107 = vmor %vm105, %vm106
  %v108 = vsel %vm107, %v99, %v104
  %v109 = vrsqrt.pop %v78
  %v110 = vmul.f32 %v109, %v78
  %v111 = vmul.f32 %v110, %v109
  %v112 = vmul.f32 0.5, %v111
  %v113 = vsub.f32 1.5, %v112
  %v114 = vmul.f32 %v109, %v113
  %vm115 = vweird.f32 %v78
  %vm116 = vweird.f32 %v109
  %vm117 = vmor %vm115, %vm116
  %v118 = vsel %vm117, %v109, %v114
  %v119 = vmul.f32 %v51, %v88
  %v120 = vmul.f32 %v52, %v98
  %v121 = vmul.f32 %v53, %v108
  %v122 = vmul.f32 %v54, %v118
  %v124 = vperm.slane %v25, 0
  %v126 = vmul.f32 %v119, %v124
  %v127 = vmul.f32 %v120, %v124
  %v128 = vmul.f32 %v121, %v124
  %v129 = vmul.f32 %v122, %v124
  %v131 = vperm.slane %v26, 0
  %v133 = vadd.f32 %v126, %v131
  %v134 = vadd.f32 %v127, %v131
  %v135 = vadd.f32 %v128, %v131
  %v136 = vadd.f32 %v129, %v131
  %v137 = vpack.c.bf16 %v134, %v133
  %v138 = vpack.c.bf16 %v136, %v135
  %v139 = vld [vmem:[%s3] sm:$0xf]
  %v140 = vld [vmem:[%s3 + $0x4] sm:$0xf]
  %v141 = vld [vmem:[%s3 + $0x8] sm:$0xf]
  %v142 = vld [vmem:[%s3 + $0xc] sm:$0xf]
  %v143 = vld [vmem:[%s4] sm:$0x1]
  %v145 = vperm.slane %v143, 0
  %v151 = vunpack.c.l.b16 %v139
  %v152 = vunpack.c.l.b16 %v140
  %v153 = vunpack.c.l.b16 %v141
  %v154 = vunpack.c.l.b16 %v142
  %v155 = vpack.c.b16 %v152, %v151
  %v156 = vpack.c.b16 %v154, %v153
  %v160 = vsel %vm27, %v137, 0
  %v163 = vsel %vm27, %v138, 0
  %165 = vmatpush.bf16.msra.mxu0 0
  %166 = vmatpush.bf16.msra.mxu0 0
  %167 = vmatpush.bf16.msra.mxu0 0
  %168 = vmatpush.bf16.msra.mxu0 0
  %169 = vmatpush.bf16.msra.mxu0 0
  %170 = vmatpush.bf16.msra.mxu0 0
  %171 = vmatpush.bf16.msra.mxu0 %v156
  %172 = vmatpush.bf16.msra.mxu0 %v155
  %173 = vmatmul.bf16.gmra.mxu0 %v160
  %v174 = vpop.f32.mrf.mxu0
  %v175 = vadd.f32 %v145, %v174
  %v176 = vpop.f32.mrf.mxu0
  %v177 = vadd.f32 %v145, %v176
  %178 = vmatmul.bf16.gmra.mxu0 %v163
  %v179 = vpop.f32.mrf.mxu0
  %v180 = vadd.f32 %v145, %v179
  %v181 = vpop.f32.mrf.mxu0
  %v182 = vadd.f32 %v145, %v181
  %183 = vdwg.mxu0
  %184 = vst [vmem:[%s5] sm:$0xff] %v175
  %185 = vst [vmem:[%s5 + $0x8] sm:$0xff] %v177
  %186 = vst [vmem:[%s5 + $0x10] sm:$0xff] %v180
  %187 = vst [vmem:[%s5 + $0x18] sm:$0xff] %v182
  // Predicated region
  $region22: #{_lambda_.5} parent=0 // pred_check
    _
  $region23: #{_lambda_.5} parent=0 // pred_check_branch
    %189 = sbr.rel (0) target = $region25
  $region24: #{_lambda_.5} parent=0 // pred_region
    _
  $region25: #{_lambda_.5} parent=0 // pred_fallthru
    _
  // Predicated region
  $region26: #{_lambda_.5} parent=0 // pred_check
    _
  $region27: #{_lambda_.5} parent=0 // pred_check_branch
    %191 = sbr.rel (0) target = $region29
  $region28: #{_lambda_.5} parent=0 // pred_region
    _
  $region29: #{_lambda_.5} parent=0 // pred_fallthru
    _

// kernel: _lambda_.3
$region0: #{_lambda_.3}
  #allocation0 [shape = 'u32[]', space=smem, size = 0x4, offset = 0x4, fixed_abs, tag = 'smem constant byte address 0x4 - core index']
  #allocation1 [shape = 'u32[72,128]{1,0:T(1,128)}', space=vmem, size = 0x9000, scoped, tag = 'internal scratch']
  %s0 = inlined_call_operand.vmem [shape: f32[32,48], index: 0, kind: input, shape index: {}]
  %s1 = inlined_call_operand.vmem [shape: bf16[48,32], index: 1, kind: input, shape index: {}]
  %s2 = inlined_call_operand.vmem [shape: f32[1,32], index: 2, kind: input, shape index: {}]
  %s3 = inlined_call_operand.vmem [shape: f32[32,32], index: 3, kind: input, shape index: {}]
  %s4 = inlined_call_operand.vmem [shape: f32[32,32], index: 4, kind: output, shape index: {}]
  %s5 = sld [smem:[#allocation0]]
  $region26: #{_lambda_.3} parent=0
    _
  %s7 = ssub.s32 1, %s5
  %s8 = scalar_select 0, %s7, %s5
  // Predicated region
  $region2: #{_lambda_.3} parent=0 // pred_check
    _
  $region3: #{_lambda_.3} parent=0 // pred_check_branch
    %10 = sbr.rel (0) target = $region5
  $region4: #{_lambda_.3} parent=0 // pred_region
    _
  $region5: #{_lambda_.3} parent=0 // pred_fallthru
    _
  // Predicated region
  $region6: #{_lambda_.3} parent=0 // pred_check
    _
  $region7: #{_lambda_.3} parent=0 // pred_check_branch
    %12 = sbr.rel (0) target = $region9
  $region8: #{_lambda_.3} parent=0 // pred_region
    _
  $region9: #{_lambda_.3} parent=0 // pred_fallthru
    _
  // Predicated region
  $region10: #{_lambda_.3} parent=0 // pred_check
    _
  $region11: #{_lambda_.3} parent=0 // pred_check_branch
    %14 = sbr.rel (0) target = $region13
  $region12: #{_lambda_.3} parent=0 // pred_region
    _
  $region13: #{_lambda_.3} parent=0 // pred_fallthru
    _
  // Predicated region
  $region14: #{_lambda_.3} parent=0 // pred_check
    _
  $region15: #{_lambda_.3} parent=0 // pred_check_branch
    %16 = sbr.rel (0) target = $region17
  $region16: #{_lambda_.3} parent=0 // pred_region
    _
  $region17: #{_lambda_.3} parent=0 // pred_fallthru
    _
  %v18 = vld [vmem:[%s0] sm:$0xff]
  %v19 = vld [vmem:[%s0 + $0x8] sm:$0xff]
  %v20 = vld [vmem:[%s0 + $0x10] sm:$0xff]
  %v21 = vld [vmem:[%s0 + $0x18] sm:$0xff]
  %v22 = vpack.c.bf16 %v19, %v18
  %v23 = vpack.c.bf16 %v21, %v20
  %v24 = vld [vmem:[%s1] sm:$0xf]
  %v25 = vld [vmem:[%s1 + $0x4] sm:$0xf]
  %v26 = vld [vmem:[%s1 + $0x8] sm:$0xf]
  %v27 = vld [vmem:[%s1 + $0xc] sm:$0xf]
  %v28 = vld [vmem:[%s1 + $0x10] sm:$0xf]
  %v29 = vld [vmem:[%s1 + $0x14] sm:$0xf]
  %v30 = vld [vmem:[%s2] sm:$0x1]
  %v32 = vperm.slane %v30, 0
  %v40 = vunpack.c.l.b16 %v24
  %v41 = vunpack.c.l.b16 %v25
  %v42 = vunpack.c.l.b16 %v26
  %v43 = vunpack.c.l.b16 %v27
  %v44 = vunpack.c.l.b16 %v28
  %v45 = vunpack.c.l.b16 %v29
  %v46 = vpack.c.b16 %v41, %v40
  %v47 = vpack.c.b16 %v43, %v42
  %v48 = vpack.c.b16 %v45, %v44
  %vm52 = vcmask 392192
  %v54 = vsel %vm52, %v22, 0
  %v57 = vsel %vm52, %v23, 0
  %59 = vmatpush.bf16.msra.mxu0 0
  %60 = vmatpush.bf16.msra.mxu0 0
  %61 = vmatpush.bf16.msra.mxu0 0
  %62 = vmatpush.bf16.msra.mxu0 0
  %63 = vmatpush.bf16.msra.mxu0 0
  %64 = vmatpush.bf16.msra.mxu0 %v48
  %65 = vmatpush.bf16.msra.mxu0 %v47
  %66 = vmatpush.bf16.msra.mxu0 %v46
  %67 = vmatmul.bf16.gmra.mxu0 %v54
  %v68 = vpop.f32.mrf.mxu0
  %v69 = vadd.f32 %v32, %v68
  %v70 = vpop.f32.mrf.mxu0
  %v71 = vadd.f32 %v32, %v70
  %72 = vmatmul.bf16.gmra.mxu0 %v57
  %v73 = vpop.f32.mrf.mxu0
  %v74 = vadd.f32 %v32, %v73
  %v75 = vpop.f32.mrf.mxu0
  %v76 = vadd.f32 %v32, %v75
  %77 = vdwg.mxu0
  %v78 = vld [vmem:[%s3] sm:$0xff]
  %v79 = vld [vmem:[%s3 + $0x8] sm:$0xff]
  %v80 = vld [vmem:[%s3 + $0x10] sm:$0xff]
  %v81 = vld [vmem:[%s3 + $0x18] sm:$0xff]
  %v82 = vadd.f32 %v69, %v78
  %v83 = vadd.f32 %v71, %v79
  %v84 = vadd.f32 %v74, %v80
  %v85 = vadd.f32 %v76, %v81
  %vm86 = vcmask 261120
  %87 = vst.msk [vmem:[%s4] sm:$0xff] %vm86, %v82
  %88 = vst.msk [vmem:[%s4 + $0x8] sm:$0xff] %vm86, %v83
  %89 = vst.msk [vmem:[%s4 + $0x10] sm:$0xff] %vm86, %v84
  %90 = vst.msk [vmem:[%s4 + $0x18] sm:$0xff] %vm86, %v85
  // Predicated region
  $region18: #{_lambda_.3} parent=0 // pred_check
    _
  $region19: #{_lambda_.3} parent=0 // pred_check_branch
    %92 = sbr.rel (0) target = $region21
  $region20: #{_lambda_.3} parent=0 // pred_region
    _
  $region21: #{_lambda_.3} parent=0 // pred_fallthru
    _
  // Predicated region
  $region22: #{_lambda_.3} parent=0 // pred_check
    _
  $region23: #{_lambda_.3} parent=0 // pred_check_branch
    %94 = sbr.rel (0) target = $region25
  $region24: #{_lambda_.3} parent=0 // pred_region
    _
  $region25: #{_lambda_.3} parent=0 // pred_fallthru
    _

// kernel: _lambda_.4
$region0: #{_lambda_.4}
  #allocation0 [shape = 'u32[]', space=smem, size = 0x4, offset = 0x4, fixed_abs, tag = 'smem constant byte address 0x4 - core index']
  #allocation1 [shape = 'u32[72,128]{1,0:T(1,128)}', space=vmem, size = 0x9000, scoped, tag = 'internal scratch']
  #allocation2 [shape = 'f32[32,32]{1,0:T(8,128)}', space=vmem, size = 0x4000, scoped, tag = 'scratch operand']
  %s0 = inlined_call_operand.vmem [shape: f32[32,32], index: 0, kind: input, shape index: {}]
  %s1 = inlined_call_operand.vmem [shape: f32[2,1,32], index: 1, kind: input, shape index: {}]
  %s2 = inlined_call_operand.vmem [shape: f32[2,1,32], index: 2, kind: input, shape index: {}]
  %s3 = inlined_call_operand.vmem [shape: bf16[2,32,96], index: 3, kind: input, shape index: {}]
  %s4 = inlined_call_operand.vmem [shape: f32[2,1,96], index: 4, kind: input, shape index: {}]
  %s5 = inlined_call_operand.vmem [shape: bf16[2,32,32], index: 5, kind: input, shape index: {}]
  %s6 = inlined_call_operand.vmem [shape: f32[2,1,32], index: 6, kind: input, shape index: {}]
  %s7 = inlined_call_operand.vmem [shape: f32[2,1,32], index: 7, kind: input, shape index: {}]
  %s8 = inlined_call_operand.vmem [shape: f32[2,1,32], index: 8, kind: input, shape index: {}]
  %s9 = inlined_call_operand.vmem [shape: bf16[2,32,128], index: 9, kind: input, shape index: {}]
  %s10 = inlined_call_operand.vmem [shape: f32[2,1,128], index: 10, kind: input, shape index: {}]
  %s11 = inlined_call_operand.vmem [shape: bf16[2,128,32], index: 11, kind: input, shape index: {}]
  %s12 = inlined_call_operand.vmem [shape: f32[2,1,32], index: 12, kind: input, shape index: {}]
  %s13 = inlined_call_operand.vmem [shape: f32[32,32], index: 13, kind: output, shape index: {}]
  %s14 = sld [smem:[#allocation0]]
  $region93: #{_lambda_.4} parent=0
    _
  %s16 = ssub.s32 1, %s14
  %s17 = scalar_select 0, %s16, %s14
  loop: start=0, step=1, limit=4
  $region2: #{_lambda_.4} parent=0 // loop_pre_header
    _
  $region3: #{_lambda_.4} parent=0 // loop_header
    %s19 = sphi 0, %s23
    %p20 = scmp.ge.s32.totalorder %s19, 4
    %s26 = sphi 0, %s38
    %s27 = sphi 0, %s34
    %s28 = sphi 0, %s26
    %s29 = sphi 0, %s27
    %s30 = sphi 0, %s28
    %s31 = sphi 0, %s29
    %s41 = sphi 0, %s43
    %s44 = sphi 0, %s41
    %s45 = sphi 0, %s44
    %s61 = sphi 0, %s45
    %s67 = sphi 0, %s69
    %s70 = sphi 0, %s67
    %s71 = sphi 0, %s70
    %s87 = sphi 0, %s71
    %s93 = sphi 0, %s95
    %s96 = sphi 0, %s93
    %s97 = sphi 0, %s96
    %s113 = sphi 0, %s97
    %s119 = sphi 0, %s121
    %s122 = sphi 0, %s119
    %s123 = sphi 0, %s122
    %s139 = sphi 0, %s123
    %s145 = sphi 0, %s147
    %s148 = sphi 0, %s145
    %s149 = sphi 0, %s148
    %s165 = sphi 0, %s149
    %s171 = sphi 0, %s173
    %s174 = sphi 0, %s171
    %s175 = sphi 0, %s174
    %s191 = sphi 0, %s175
    %s197 = sphi 0, %s199
    %s200 = sphi 0, %s197
    %s201 = sphi 0, %s200
    %s217 = sphi 0, %s201
    %s223 = sphi 0, %s225
    %s226 = sphi 0, %s223
    %s227 = sphi 0, %s226
    %s243 = sphi 0, %s227
    %s249 = sphi 0, %s251
    %s252 = sphi 0, %s249
    %s253 = sphi 0, %s252
    %s269 = sphi 0, %s253
    %s275 = sphi 0, %s277
    %s278 = sphi 0, %s275
    %s279 = sphi 0, %s278
    %s295 = sphi 0, %s279
    %s301 = sphi 0, %s303
    %s304 = sphi 0, %s301
    %s305 = sphi 0, %s304
    %s321 = sphi 0, %s305
    %s327 = sphi 0, %s329
    %s330 = sphi 0, %s327
    %s331 = sphi 0, %s330
    %s347 = sphi 0, %s331
    %s353 = sphi 0, %s355
    %s356 = sphi 0, %s353
    %s357 = sphi 0, %s356
    %s373 = sphi 0, %s357
    %s379 = sphi 0, %s381
    %s382 = sphi 0, %s379
    %s383 = sphi 0, %s382
    %s399 = sphi 0, %s383
  $region4: #{_lambda_.4} parent=0 // loop_header_branch
    %22 = sbr.rel (%p20) target = $region8
  $region5: #{_lambda_.4} parent=0 // loop_body
    %s24 = ssub.s32 %s19, 1
    %s25 = ssub.s32 %s19, 2
    %s32 = sadd.s32 1, %s27
    %p33 = scmp.ge.s32.totalorder %s32, 2
    %s34 = scalar_select %p33, 0, %s32
    %s35 = sadd.s32 1, %s26
    %s36 = scalar_select %p33, %s35, %s26
    %p37 = scmp.ge.s32.totalorder %s36, 1
    %s38 = scalar_select %p37, 0, %s36
    %s39 = ssub.s32 %s26, %s38
    %p40 = scmp.eq.s32.totalorder %s39, 0
    %s42 = sadd.s32 %s41, 1
    %s43 = scalar_select %p40, %s41, %s42
    %p46 = pneg %p40
    %p47 = scmp.eq.s32.totalorder %s19, 1
    %p48 = por %p46, %p47
    %p49 = scmp.ne.s32.totalorder %s41, %s44
    %p50 = scmp.eq.s32.totalorder %s19, 0
    %p51 = por %p49, %p50
    %p52 = scmp.ne.s32.totalorder %s41, %s44
    %p53 = scmp.eq.s32.totalorder %s24, 1
    %p54 = por %p52, %p53
    %p55 = scmp.ne.s32.totalorder %s44, %s45
    %p56 = scmp.eq.s32.totalorder %s24, 0
    %p57 = por %p55, %p56
    %p58 = scmp.ne.s32.totalorder %s44, %s45
    %p59 = scmp.eq.s32.totalorder %s25, 1
    %p60 = por %p58, %p59
    %p62 = scmp.ne.s32.totalorder %s45, %s61
    %p63 = scmp.eq.s32.totalorder %s25, 0
    %p64 = por %p62, %p63
    %s65 = ssub.s32 %s27, %s34
    %p66 = scmp.eq.s32.totalorder %s65, 0
    %s68 = sadd.s32 %s67, 1
    %s69 = scalar_select %p66, %s67, %s68
    %p72 = pneg %p66
    %p73 = scmp.eq.s32.totalorder %s19, 1
    %p74 = por %p72, %p73
    %p75 = scmp.ne.s32.totalorder %s67, %s70
    %p76 = scmp.eq.s32.totalorder %s19, 0
    %p77 = por %p75, %p76
    %p78 = scmp.ne.s32.totalorder %s67, %s70
    %p79 = scmp.eq.s32.totalorder %s24, 1
    %p80 = por %p78, %p79
    %p81 = scmp.ne.s32.totalorder %s70, %s71
    %p82 = scmp.eq.s32.totalorder %s24, 0
    %p83 = por %p81, %p82
    %p84 = scmp.ne.s32.totalorder %s70, %s71
    %p85 = scmp.eq.s32.totalorder %s25, 1
    %p86 = por %p84, %p85
    %p88 = scmp.ne.s32.totalorder %s71, %s87
    %p89 = scmp.eq.s32.totalorder %s25, 0
    %p90 = por %p88, %p89
    %s91 = ssub.s32 %s27, %s34
    %p92 = scmp.eq.s32.totalorder %s91, 0
    %s94 = sadd.s32 %s93, 1
    %s95 = scalar_select %p92, %s93, %s94
    %p98 = pneg %p92
    %p99 = scmp.eq.s32.totalorder %s19, 1
    %p100 = por %p98, %p99
    %p101 = scmp.ne.s32.totalorder %s93, %s96
    %p102 = scmp.eq.s32.totalorder %s19, 0
    %p103 = por %p101, %p102
    %p104 = scmp.ne.s32.totalorder %s93, %s96
    %p105 = scmp.eq.s32.totalorder %s24, 1
    %p106 = por %p104, %p105
    %p107 = scmp.ne.s32.totalorder %s96, %s97
    %p108 = scmp.eq.s32.totalorder %s24, 0
    %p109 = por %p107, %p108
    %p110 = scmp.ne.s32.totalorder %s96, %s97
    %p111 = scmp.eq.s32.totalorder %s25, 1
    %p112 = por %p110, %p111
    %p114 = scmp.ne.s32.totalorder %s97, %s113
    %p115 = scmp.eq.s32.totalorder %s25, 0
    %p116 = por %p114, %p115
    %s117 = ssub.s32 %s27, %s34
    %p118 = scmp.eq.s32.totalorder %s117, 0
    %s120 = sadd.s32 %s119, 1
    %s121 = scalar_select %p118, %s119, %s120
    %p124 = pneg %p118
    %p125 = scmp.eq.s32.totalorder %s19, 1
    %p126 = por %p124, %p125
    %p127 = scmp.ne.s32.totalorder %s119, %s122
    %p128 = scmp.eq.s32.totalorder %s19, 0
    %p129 = por %p127, %p128
    %p130 = scmp.ne.s32.totalorder %s119, %s122
    %p131 = scmp.eq.s32.totalorder %s24, 1
    %p132 = por %p130, %p131
    %p133 = scmp.ne.s32.totalorder %s122, %s123
    %p134 = scmp.eq.s32.totalorder %s24, 0
    %p135 = por %p133, %p134
    %p136 = scmp.ne.s32.totalorder %s122, %s123
    %p137 = scmp.eq.s32.totalorder %s25, 1
    %p138 = por %p136, %p137
    %p140 = scmp.ne.s32.totalorder %s123, %s139
    %p141 = scmp.eq.s32.totalorder %s25, 0
    %p142 = por %p140, %p141
    %s143 = ssub.s32 %s27, %s34
    %p144 = scmp.eq.s32.totalorder %s143, 0
    %s146 = sadd.s32 %s145, 1
    %s147 = scalar_select %p144, %s145, %s146
    %p150 = pneg %p144
    %p151 = scmp.eq.s32.totalorder %s19, 1
    %p152 = por %p150, %p151
    %p153 = scmp.ne.s32.totalorder %s145, %s148
    %p154 = scmp.eq.s32.totalorder %s19, 0
    %p155 = por %p153, %p154
    %p156 = scmp.ne.s32.totalorder %s145, %s148
    %p157 = scmp.eq.s32.totalorder %s24, 1
    %p158 = por %p156, %p157
    %p159 = scmp.ne.s32.totalorder %s148, %s149
    %p160 = scmp.eq.s32.totalorder %s24, 0
    %p161 = por %p159, %p160
    %p162 = scmp.ne.s32.totalorder %s148, %s149
    %p163 = scmp.eq.s32.totalorder %s25, 1
    %p164 = por %p162, %p163
    %p166 = scmp.ne.s32.totalorder %s149, %s165
    %p167 = scmp.eq.s32.totalorder %s25, 0
    %p168 = por %p166, %p167
    %s169 = ssub.s32 %s27, %s34
    %p170 = scmp.eq.s32.totalorder %s169, 0
    %s172 = sadd.s32 %s171, 1
    %s173 = scalar_select %p170, %s171, %s172
    %p176 = pneg %p170
    %p177 = scmp.eq.s32.totalorder %s19, 1
    %p178 = por %p176, %p177
    %p179 = scmp.ne.s32.totalorder %s171, %s174
    %p180 = scmp.eq.s32.totalorder %s19, 0
    %p181 = por %p179, %p180
    %p182 = scmp.ne.s32.totalorder %s171, %s174
    %p183 = scmp.eq.s32.totalorder %s24, 1
    %p184 = por %p182, %p183
    %p185 = scmp.ne.s32.totalorder %s174, %s175
    %p186 = scmp.eq.s32.totalorder %s24, 0
    %p187 = por %p185, %p186
    %p188 = scmp.ne.s32.totalorder %s174, %s175
    %p189 = scmp.eq.s32.totalorder %s25, 1
    %p190 = por %p188, %p189
    %p192 = scmp.ne.s32.totalorder %s175, %s191
    %p193 = scmp.eq.s32.totalorder %s25, 0
    %p194 = por %p192, %p193
    %s195 = ssub.s32 %s27, %s34
    %p196 = scmp.eq.s32.totalorder %s195, 0
    %s198 = sadd.s32 %s197, 1
    %s199 = scalar_select %p196, %s197, %s198
    %p202 = pneg %p196
    %p203 = scmp.eq.s32.totalorder %s19, 1
    %p204 = por %p202, %p203
    %p205 = scmp.ne.s32.totalorder %s197, %s200
    %p206 = scmp.eq.s32.totalorder %s19, 0
    %p207 = por %p205, %p206
    %p208 = scmp.ne.s32.totalorder %s197, %s200
    %p209 = scmp.eq.s32.totalorder %s24, 1
    %p210 = por %p208, %p209
    %p211 = scmp.ne.s32.totalorder %s200, %s201
    %p212 = scmp.eq.s32.totalorder %s24, 0
    %p213 = por %p211, %p212
    %p214 = scmp.ne.s32.totalorder %s200, %s201
    %p215 = scmp.eq.s32.totalorder %s25, 1
    %p216 = por %p214, %p215
    %p218 = scmp.ne.s32.totalorder %s201, %s217
    %p219 = scmp.eq.s32.totalorder %s25, 0
    %p220 = por %p218, %p219
    %s221 = ssub.s32 %s27, %s34
    %p222 = scmp.eq.s32.totalorder %s221, 0
    %s224 = sadd.s32 %s223, 1
    %s225 = scalar_select %p222, %s223, %s224
    %p228 = pneg %p222
    %p229 = scmp.eq.s32.totalorder %s19, 1
    %p230 = por %p228, %p229
    %p231 = scmp.ne.s32.totalorder %s223, %s226
    %p232 = scmp.eq.s32.totalorder %s19, 0
    %p233 = por %p231, %p232
    %p234 = scmp.ne.s32.totalorder %s223, %s226
    %p235 = scmp.eq.s32.totalorder %s24, 1
    %p236 = por %p234, %p235
    %p237 = scmp.ne.s32.totalorder %s226, %s227
    %p238 = scmp.eq.s32.totalorder %s24, 0
    %p239 = por %p237, %p238
    %p240 = scmp.ne.s32.totalorder %s226, %s227
    %p241 = scmp.eq.s32.totalorder %s25, 1
    %p242 = por %p240, %p241
    %p244 = scmp.ne.s32.totalorder %s227, %s243
    %p245 = scmp.eq.s32.totalorder %s25, 0
    %p246 = por %p244, %p245
    %s247 = ssub.s32 %s27, %s34
    %p248 = scmp.eq.s32.totalorder %s247, 0
    %s250 = sadd.s32 %s249, 1
    %s251 = scalar_select %p248, %s249, %s250
    %p254 = pneg %p248
    %p255 = scmp.eq.s32.totalorder %s19, 1
    %p256 = por %p254, %p255
    %p257 = scmp.ne.s32.totalorder %s249, %s252
    %p258 = scmp.eq.s32.totalorder %s19, 0
    %p259 = por %p257, %p258
    %p260 = scmp.ne.s32.totalorder %s249, %s252
    %p261 = scmp.eq.s32.totalorder %s24, 1
    %p262 = por %p260, %p261
    %p263 = scmp.ne.s32.totalorder %s252, %s253
    %p264 = scmp.eq.s32.totalorder %s24, 0
    %p265 = por %p263, %p264
    %p266 = scmp.ne.s32.totalorder %s252, %s253
    %p267 = scmp.eq.s32.totalorder %s25, 1
    %p268 = por %p266, %p267
    %p270 = scmp.ne.s32.totalorder %s253, %s269
    %p271 = scmp.eq.s32.totalorder %s25, 0
    %p272 = por %p270, %p271
    %s273 = ssub.s32 %s27, %s34
    %p274 = scmp.eq.s32.totalorder %s273, 0
    %s276 = sadd.s32 %s275, 1
    %s277 = scalar_select %p274, %s275, %s276
    %p280 = pneg %p274
    %p281 = scmp.eq.s32.totalorder %s19, 1
    %p282 = por %p280, %p281
    %p283 = scmp.ne.s32.totalorder %s275, %s278
    %p284 = scmp.eq.s32.totalorder %s19, 0
    %p285 = por %p283, %p284
    %p286 = scmp.ne.s32.totalorder %s275, %s278
    %p287 = scmp.eq.s32.totalorder %s24, 1
    %p288 = por %p286, %p287
    %p289 = scmp.ne.s32.totalorder %s278, %s279
    %p290 = scmp.eq.s32.totalorder %s24, 0
    %p291 = por %p289, %p290
    %p292 = scmp.ne.s32.totalorder %s278, %s279
    %p293 = scmp.eq.s32.totalorder %s25, 1
    %p294 = por %p292, %p293
    %p296 = scmp.ne.s32.totalorder %s279, %s295
    %p297 = scmp.eq.s32.totalorder %s25, 0
    %p298 = por %p296, %p297
    %s299 = ssub.s32 %s27, %s34
    %p300 = scmp.eq.s32.totalorder %s299, 0
    %s302 = sadd.s32 %s301, 1
    %s303 = scalar_select %p300, %s301, %s302
    %p306 = pneg %p300
    %p307 = scmp.eq.s32.totalorder %s19, 1
    %p308 = por %p306, %p307
    %p309 = scmp.ne.s32.totalorder %s301, %s304
    %p310 = scmp.eq.s32.totalorder %s19, 0
    %p311 = por %p309, %p310
    %p312 = scmp.ne.s32.totalorder %s301, %s304
    %p313 = scmp.eq.s32.totalorder %s24, 1
    %p314 = por %p312, %p313
    %p315 = scmp.ne.s32.totalorder %s304, %s305
    %p316 = scmp.eq.s32.totalorder %s24, 0
    %p317 = por %p315, %p316
    %p318 = scmp.ne.s32.totalorder %s304, %s305
    %p319 = scmp.eq.s32.totalorder %s25, 1
    %p320 = por %p318, %p319
    %p322 = scmp.ne.s32.totalorder %s305, %s321
    %p323 = scmp.eq.s32.totalorder %s25, 0
    %p324 = por %p322, %p323
    %s325 = ssub.s32 %s27, %s34
    %p326 = scmp.eq.s32.totalorder %s325, 0
    %s328 = sadd.s32 %s327, 1
    %s329 = scalar_select %p326, %s327, %s328
    %p332 = pneg %p326
    %p333 = scmp.eq.s32.totalorder %s19, 1
    %p334 = por %p332, %p333
    %p335 = scmp.ne.s32.totalorder %s327, %s330
    %p336 = scmp.eq.s32.totalorder %s19, 0
    %p337 = por %p335, %p336
    %p338 = scmp.ne.s32.totalorder %s327, %s330
    %p339 = scmp.eq.s32.totalorder %s24, 1
    %p340 = por %p338, %p339
    %p341 = scmp.ne.s32.totalorder %s330, %s331
    %p342 = scmp.eq.s32.totalorder %s24, 0
    %p343 = por %p341, %p342
    %p344 = scmp.ne.s32.totalorder %s330, %s331
    %p345 = scmp.eq.s32.totalorder %s25, 1
    %p346 = por %p344, %p345
    %p348 = scmp.ne.s32.totalorder %s331, %s347
    %p349 = scmp.eq.s32.totalorder %s25, 0
    %p350 = por %p348, %p349
    %s351 = ssub.s32 %s27, %s34
    %p352 = scmp.eq.s32.totalorder %s351, 0
    %s354 = sadd.s32 %s353, 1
    %s355 = scalar_select %p352, %s353, %s354
    %p358 = pneg %p352
    %p359 = scmp.eq.s32.totalorder %s19, 1
    %p360 = por %p358, %p359
    %p361 = scmp.ne.s32.totalorder %s353, %s356
    %p362 = scmp.eq.s32.totalorder %s19, 0
    %p363 = por %p361, %p362
    %p364 = scmp.ne.s32.totalorder %s353, %s356
    %p365 = scmp.eq.s32.totalorder %s24, 1
    %p366 = por %p364, %p365
    %p367 = scmp.ne.s32.totalorder %s356, %s357
    %p368 = scmp.eq.s32.totalorder %s24, 0
    %p369 = por %p367, %p368
    %p370 = scmp.ne.s32.totalorder %s356, %s357
    %p371 = scmp.eq.s32.totalorder %s25, 1
    %p372 = por %p370, %p371
    %p374 = scmp.ne.s32.totalorder %s357, %s373
    %p375 = scmp.eq.s32.totalorder %s25, 0
    %p376 = por %p374, %p375
    %s377 = ssub.s32 %s26, %s38
    %p378 = scmp.eq.s32.totalorder %s377, 0
    %s380 = sadd.s32 %s379, 1
    %s381 = scalar_select %p378, %s379, %s380
    %p384 = pneg %p378
    %p385 = scmp.eq.s32.totalorder %s19, 1
    %p386 = por %p384, %p385
    %p387 = scmp.ne.s32.totalorder %s379, %s382
    %p388 = scmp.eq.s32.totalorder %s19, 0
    %p389 = por %p387, %p388
    %p390 = scmp.ne.s32.totalorder %s379, %s382
    %p391 = scmp.eq.s32.totalorder %s24, 1
    %p392 = por %p390, %p391
    %p393 = scmp.ne.s32.totalorder %s382, %s383
    %p394 = scmp.eq.s32.totalorder %s24, 0
    %p395 = por %p393, %p394
    %p396 = scmp.ne.s32.totalorder %s382, %s383
    %p397 = scmp.eq.s32.totalorder %s25, 1
    %p398 = por %p396, %p397
    %p400 = scmp.ne.s32.totalorder %s383, %s399
    %p401 = scmp.eq.s32.totalorder %s25, 0
    %p402 = por %p400, %p401
    %p403 = scmp.le.s32.totalorder 1, %s19
    %p404 = scmp.lt.s32.totalorder %s19, 3
    %p405 = pnand %p403, %p404
    %p406 = pneg %p405
    // Predicated region
    $region9: #{_lambda_.4} parent=5 // pred_check
      _
    $region10: #{_lambda_.4} parent=5 // pred_check_branch
      %408 = sbr.rel (%p405) target = $region12
    $region11: #{_lambda_.4} parent=5 // pred_region
      %s409 = ssub.s32 %s19, 1
      // Predicated region
      $region13: #{_lambda_.4} parent=11 // pred_check
        %p410 = pneg %p57
      $region14: #{_lambda_.4} parent=11 // pred_check_branch
        %412 = sbr.rel (%p410) target = $region16
      $region15: #{_lambda_.4} parent=11 // pred_region
        %s413 = smul.u32 4, %s28
        %p414 = scmp.lt.s32.totalorder %s413, 3
        %s415 = scalar_select %p414, %s413, 3
        %s416 = smul.addr %s415, 8
        %s417 = scalar_lea.vmem %s0, %s416
        %s418 = smul.u32 4, %s28
      $region16: #{_lambda_.4} parent=11 // pred_fallthru
        _
    $region12: #{_lambda_.4} parent=5 // pred_fallthru
      _
    %p419 = scmp.lt.s32.totalorder %s19, 2
    // Predicated region
    $region17: #{_lambda_.4} parent=5 // pred_check
      %p420 = pneg %p419
    $region18: #{_lambda_.4} parent=5 // pred_check_branch
      %422 = sbr.rel (%p420) target = $region20
    $region19: #{_lambda_.4} parent=5 // pred_region
      // Predicated region
      $region21: #{_lambda_.4} parent=19 // pred_check
        %p423 = pneg %p77
      $region22: #{_lambda_.4} parent=19 // pred_check_branch
        %425 = sbr.rel (%p423) target = $region24
      $region23: #{_lambda_.4} parent=19 // pred_region
        %p426 = scmp.lt.s32.totalorder %s27, 1
        %s427 = scalar_select %p426, %s27, 1
        %s428 = scalar_lea.vmem %s1, %s427
      $region24: #{_lambda_.4} parent=19 // pred_fallthru
        _
      // Predicated region
      $region25: #{_lambda_.4} parent=19 // pred_check
        %p429 = pneg %p103
      $region26: #{_lambda_.4} parent=19 // pred_check_branch
        %431 = sbr.rel (%p429) target = $region28
      $region27: #{_lambda_.4} parent=19 // pred_region
        %p432 = scmp.lt.s32.totalorder %s27, 1
        %s433 = scalar_select %p432, %s27, 1
        %s434 = scalar_lea.vmem %s2, %s433
      $region28: #{_lambda_.4} parent=19 // pred_fallthru
        _
      // Predicated region
      $region29: #{_lambda_.4} parent=19 // pred_check
        %p435 = pneg %p129
      $region30: #{_lambda_.4} parent=19 // pred_check_branch
        %437 = sbr.rel (%p435) target = $region32
      $region31: #{_lambda_.4} parent=19 // pred_region
        %p438 = scmp.lt.s32.totalorder %s27, 1
        %s439 = scalar_select %p438, %s27, 1
        %s440 = smul.addr %s439, 4
        %s441 = smul.addr %s440, 4
        %s442 = scalar_lea.vmem %s3, %s441
      $region32: #{_lambda_.4} parent=19 // pred_fallthru
        _
      // Predicated region
      $region33: #{_lambda_.4} parent=19 // pred_check
        %p443 = pneg %p155
      $region34: #{_lambda_.4} parent=19 // pred_check_branch
        %445 = sbr.rel (%p443) target = $region36
      $region35: #{_lambda_.4} parent=19 // pred_region
        %p446 = scmp.lt.s32.totalorder %s27, 1
        %s447 = scalar_select %p446, %s27, 1
        %s448 = scalar_lea.vmem %s4, %s447
      $region36: #{_lambda_.4} parent=19 // pred_fallthru
        _
      // Predicated region
      $region37: #{_lambda_.4} parent=19 // pred_check
        %p449 = pneg %p181
      $region38: #{_lambda_.4} parent=19 // pred_check_branch
        %451 = sbr.rel (%p449) target = $region40
      $region39: #{_lambda_.4} parent=19 // pred_region
        %p452 = scmp.lt.s32.totalorder %s27, 1
        %s453 = scalar_select %p452, %s27, 1
        %s454 = smul.addr %s453, 4
        %s455 = smul.addr %s454, 4
        %s456 = scalar_lea.vmem %s5, %s455
      $region40: #{_lambda_.4} parent=19 // pred_fallthru
        _
      // Predicated region
      $region41: #{_lambda_.4} parent=19 // pred_check
        %p457 = pneg %p207
      $region42: #{_lambda_.4} parent=19 // pred_check_branch
        %459 = sbr.rel (%p457) target = $region44
      $region43: #{_lambda_.4} parent=19 // pred_region
        %p460 = scmp.lt.s32.totalorder %s27, 1
        %s461 = scalar_select %p460, %s27, 1
        %s462 = scalar_lea.vmem %s6, %s461
      $region44: #{_lambda_.4} parent=19 // pred_fallthru
        _
      // Predicated region
      $region45: #{_lambda_.4} parent=19 // pred_check
        %p463 = pneg %p233
      $region46: #{_lambda_.4} parent=19 // pred_check_branch
        %465 = sbr.rel (%p463) target = $region48
      $region47: #{_lambda_.4} parent=19 // pred_region
        %p466 = scmp.lt.s32.totalorder %s27, 1
        %s467 = scalar_select %p466, %s27, 1
        %s468 = scalar_lea.vmem %s7, %s467
      $region48: #{_lambda_.4} parent=19 // pred_fallthru
        _
      // Predicated region
      $region49: #{_lambda_.4} parent=19 // pred_check
        %p469 = pneg %p259
      $region50: #{_lambda_.4} parent=19 // pred_check_branch
        %471 = sbr.rel (%p469) target = $region52
      $region51: #{_lambda_.4} parent=19 // pred_region
        %p472 = scmp.lt.s32.totalorder %s27, 1
        %s473 = scalar_select %p472, %s27, 1
        %s474 = scalar_lea.vmem %s8, %s473
      $region52: #{_lambda_.4} parent=19 // pred_fallthru
        _
      // Predicated region
      $region53: #{_lambda_.4} parent=19 // pred_check
        %p475 = pneg %p285
      $region54: #{_lambda_.4} parent=19 // pred_check_branch
        %477 = sbr.rel (%p475) target = $region56
      $region55: #{_lambda_.4} parent=19 // pred_region
        %p478 = scmp.lt.s32.totalorder %s27, 1
        %s479 = scalar_select %p478, %s27, 1
        %s480 = smul.addr %s479, 4
        %s481 = smul.addr %s480, 4
        %s482 = scalar_lea.vmem %s9, %s481
      $region56: #{_lambda_.4} parent=19 // pred_fallthru
        _
      // Predicated region
      $region57: #{_lambda_.4} parent=19 // pred_check
        %p483 = pneg %p311
      $region58: #{_lambda_.4} parent=19 // pred_check_branch
        %485 = sbr.rel (%p483) target = $region60
      $region59: #{_lambda_.4} parent=19 // pred_region
        %p486 = scmp.lt.s32.totalorder %s27, 1
        %s487 = scalar_select %p486, %s27, 1
        %s488 = scalar_lea.vmem %s10, %s487
      $region60: #{_lambda_.4} parent=19 // pred_fallthru
        _
      // Predicated region
      $region61: #{_lambda_.4} parent=19 // pred_check
        %p489 = pneg %p337
      $region62: #{_lambda_.4} parent=19 // pred_check_branch
        %491 = sbr.rel (%p489) target = $region64
      $region63: #{_lambda_.4} parent=19 // pred_region
        %p492 = scmp.lt.s32.totalorder %s27, 1
        %s493 = scalar_select %p492, %s27, 1
        %s494 = smul.addr %s493, 16
        %s495 = smul.addr %s494, 4
        %s496 = scalar_lea.vmem %s11, %s495
      $region64: #{_lambda_.4} parent=19 // pred_fallthru
        _
      // Predicated region
      $region65: #{_lambda_.4} parent=19 // pred_check
        %p497 = pneg %p363
      $region66: #{_lambda_.4} parent=19 // pred_check_branch
        %499 = sbr.rel (%p497) target = $region68
      $region67: #{_lambda_.4} parent=19 // pred_region
        %p500 = scmp.lt.s32.totalorder %s27, 1
        %s501 = scalar_select %p500, %s27, 1
        %s502 = scalar_lea.vmem %s12, %s501
      $region68: #{_lambda_.4} parent=19 // pred_fallthru
        _
    $region20: #{_lambda_.4} parent=5 // pred_fallthru
      _
    %p503 = scmp.le.s32.totalorder 1, %s19
    %p504 = scmp.lt.s32.totalorder %s19, 3
    %p505 = pnand %p503, %p504
    %p506 = pneg %p505
    // Predicated region
    $region69: #{_lambda_.4} parent=5 // pred_check
      _
    $region70: #{_lambda_.4} parent=5 // pred_check_branch
      %508 = sbr.rel (%p505) target = $region72
    $region71: #{_lambda_.4} parent=5 // pred_region
      %s509 = ssub.s32 %s19, 1
      %s510 = smul.u32 4, %s28
      %p511 = scmp.lt.s32.totalorder %s510, 3
      %s512 = scalar_select %p511, %s510, 3
      %s513 = smul.addr %s512, 8
      %s514 = scalar_lea.vmem %s0, %s513
      %p515 = pneg %p57
      %p516 = pneg %p54
      %p517 = scmp.lt.s32.totalorder %s29, 1
      %s518 = scalar_select %p517, %s29, 1
      %s519 = scalar_lea.vmem %s1, %s518
      %p520 = pneg %p83
      %p521 = pneg %p80
      %p522 = scmp.lt.s32.totalorder %s29, 1
      %s523 = scalar_select %p522, %s29, 1
      %s524 = scalar_lea.vmem %s2, %s523
      %p525 = pneg %p109
      %p526 = pneg %p106
      %p527 = scmp.lt.s32.totalorder %s29, 1
      %s528 = scalar_select %p527, %s29, 1
      %s529 = smul.addr %s528, 4
      %s530 = smul.addr %s529, 4
      %s531 = scalar_lea.vmem %s3, %s530
      %p532 = pneg %p135
      %p533 = pneg %p132
      %p534 = scmp.lt.s32.totalorder %s29, 1
      %s535 = scalar_select %p534, %s29, 1
      %s536 = scalar_lea.vmem %s4, %s535
      %p537 = pneg %p161
      %p538 = pneg %p158
      %p539 = scmp.lt.s32.totalorder %s29, 1
      %s540 = scalar_select %p539, %s29, 1
      %s541 = smul.addr %s540, 4
      %s542 = smul.addr %s541, 4
      %s543 = scalar_lea.vmem %s5, %s542
      %p544 = pneg %p187
      %p545 = pneg %p184
      %p546 = scmp.lt.s32.totalorder %s29, 1
      %s547 = scalar_select %p546, %s29, 1
      %s548 = scalar_lea.vmem %s6, %s547
      %p549 = pneg %p213
      %p550 = pneg %p210
      %p551 = scmp.lt.s32.totalorder %s29, 1
      %s552 = scalar_select %p551, %s29, 1
      %s553 = scalar_lea.vmem %s7, %s552
      %p554 = pneg %p239
      %p555 = pneg %p236
      %p556 = scmp.lt.s32.totalorder %s29, 1
      %s557 = scalar_select %p556, %s29, 1
      %s558 = scalar_lea.vmem %s8, %s557
      %p559 = pneg %p265
      %p560 = pneg %p262
      %p561 = scmp.lt.s32.totalorder %s29, 1
      %s562 = scalar_select %p561, %s29, 1
      %s563 = smul.addr %s562, 4
      %s564 = smul.addr %s563, 4
      %s565 = scalar_lea.vmem %s9, %s564
      %p566 = pneg %p291
      %p567 = pneg %p288
      %p568 = scmp.lt.s32.totalorder %s29, 1
      %s569 = scalar_select %p568, %s29, 1
      %s570 = scalar_lea.vmem %s10, %s569
      %p571 = pneg %p317
      %p572 = pneg %p314
      %p573 = scmp.lt.s32.totalorder %s29, 1
      %s574 = scalar_select %p573, %s29, 1
      %s575 = smul.addr %s574, 16
      %s576 = smul.addr %s575, 4
      %s577 = scalar_lea.vmem %s11, %s576
      %p578 = pneg %p343
      %p579 = pneg %p340
      %p580 = scmp.lt.s32.totalorder %s29, 1
      %s581 = scalar_select %p580, %s29, 1
      %s582 = scalar_lea.vmem %s12, %s581
      %p583 = pneg %p369
      %p584 = pneg %p366
      %p585 = pneg %p395
      %p586 = pneg %p392
      %s587 = smul.u32 4, %s28
      %p588 = scmp.lt.s32.totalorder %s587, 3
      %s589 = scalar_select %p588, %s587, 3
      %s590 = smul.addr %s589, 8
      %s591 = scalar_lea.vmem %s13, %s590
      %s592 = smul.u32 4, %s28
      %p593 = scmp.lt.s32.totalorder %s592, 3
      %s594 = scalar_select %p593, %s592, 3
      %s595 = smul.addr %s594, 8
      %s596 = scalar_lea.vmem %s0, %s595
      %s597 = smul.u32 4, %s28
      %p598 = scmp.lt.s32.totalorder %s29, 1
      %s599 = scalar_select %p598, %s29, 1
      %s600 = scalar_lea.vmem %s1, %s599
      %p601 = scmp.lt.s32.totalorder %s29, 1
      %s602 = scalar_select %p601, %s29, 1
      %s603 = scalar_lea.vmem %s2, %s602
      %p604 = scmp.lt.s32.totalorder %s29, 1
      %s605 = scalar_select %p604, %s29, 1
      %s606 = smul.addr %s605, 4
      %s607 = smul.addr %s606, 4
      %s608 = scalar_lea.vmem %s3, %s607
      %p609 = scmp.lt.s32.totalorder %s29, 1
      %s610 = scalar_select %p609, %s29, 1
      %s611 = scalar_lea.vmem %s4, %s610
      %p612 = scmp.lt.s32.totalorder %s29, 1
      %s613 = scalar_select %p612, %s29, 1
      %s614 = smul.addr %s613, 4
      %s615 = smul.addr %s614, 4
      %s616 = scalar_lea.vmem %s5, %s615
      %p617 = scmp.lt.s32.totalorder %s29, 1
      %s618 = scalar_select %p617, %s29, 1
      %s619 = scalar_lea.vmem %s6, %s618
      %p620 = scmp.lt.s32.totalorder %s29, 1
      %s621 = scalar_select %p620, %s29, 1
      %s622 = scalar_lea.vmem %s7, %s621
      %p623 = scmp.lt.s32.totalorder %s29, 1
      %s624 = scalar_select %p623, %s29, 1
      %s625 = scalar_lea.vmem %s8, %s624
      %p626 = scmp.lt.s32.totalorder %s29, 1
      %s627 = scalar_select %p626, %s29, 1
      %s628 = smul.addr %s627, 4
      %s629 = smul.addr %s628, 4
      %s630 = scalar_lea.vmem %s9, %s629
      %p631 = scmp.lt.s32.totalorder %s29, 1
      %s632 = scalar_select %p631, %s29, 1
      %s633 = scalar_lea.vmem %s10, %s632
      %p634 = scmp.lt.s32.totalorder %s29, 1
      %s635 = scalar_select %p634, %s29, 1
      %s636 = smul.addr %s635, 16
      %s637 = smul.addr %s636, 4
      %s638 = scalar_lea.vmem %s11, %s637
      %p639 = scmp.lt.s32.totalorder %s29, 1
      %s640 = scalar_select %p639, %s29, 1
      %s641 = scalar_lea.vmem %s12, %s640
      %s642 = smul.u32 4, %s28
      %p643 = scmp.lt.s32.totalorder %s642, 3
      %s644 = scalar_select %p643, %s642, 3
      %s645 = smul.addr %s644, 8
      %s646 = scalar_lea.vmem %s13, %s645
      %s647 = smul.u32 4, %s28
      %p649 = scmp.eq.s32.totalorder %s29, 0
      // Predicated region
      $region73: #{_lambda_.4} parent=71 // pred_check
        %p650 = pneg %p649
      $region74: #{_lambda_.4} parent=71 // pred_check_branch
        %652 = sbr.rel (%p650) target = $region76
      $region75: #{_lambda_.4} parent=71 // pred_region
        %v653 = vld [vmem:[%s596] sm:$0xff]
        %v654 = vld [vmem:[%s596 + $0x8] sm:$0xff]
        %v655 = vld [vmem:[%s596 + $0x10] sm:$0xff]
        %v656 = vld [vmem:[%s596 + $0x18] sm:$0xff]
        %vm657 = vcmask 261120
        %658 = vst.msk [vmem:[#allocation2] sm:$0xff] %vm657, %v653
        %659 = vst.msk [vmem:[#allocation2 + $0x8] sm:$0xff] %vm657, %v654
        %660 = vst.msk [vmem:[#allocation2 + $0x10] sm:$0xff] %vm657, %v655
        %661 = vst.msk [vmem:[#allocation2 + $0x18] sm:$0xff] %vm657, %v656
      $region76: #{_lambda_.4} parent=71 // pred_fallthru
        _
      %v662 = vld [vmem:[#allocation2] sm:$0xff]
      %v663 = vld [vmem:[#allocation2 + $0x8] sm:$0xff]
      %v664 = vld [vmem:[#allocation2 + $0x10] sm:$0xff]
      %v665 = vld [vmem:[#allocation2 + $0x18] sm:$0xff]
      %v666 = vld [vmem:[%s600] sm:$0x1]
      %v667 = vld [vmem:[%s603] sm:$0x1]
      %vm668 = vcmask 261120
      %v669 = vsel %vm668, %v662, 0.0
      %670 = vadd.xlane.f32.xlu0 %v669
      %v671 = vpop.xlane.xlu0 %670
      %v672 = vsel %vm668, %v663, 0.0
      %673 = vadd.xlane.f32.xlu0 %v672
      %v674 = vpop.xlane.xlu0 %673
      %v675 = vsel %vm668, %v664, 0.0
      %676 = vadd.xlane.f32.xlu0 %v675
      %v677 = vpop.xlane.xlu0 %676
      %v678 = vsel %vm668, %v665, 0.0
      %679 = vadd.xlane.f32.xlu0 %v678
      %v680 = vpop.xlane.xlu0 %679
      %v681 = vrcp.pop 32.0
      %v682 = vmul.f32 32.0, %v681
      %v683 = vsub.f32 1.0, %v682
      %v684 = vmul.f32 %v681, %v683
      %v685 = vadd.f32 %v681, %v684
      %vm686 = vweird.f32 %v681
      %v687 = vsel %vm686, %v681, %v685
      %v688 = vmul.f32 %v671, %v687
      %v689 = vmul.f32 %v674, %v687
      %v690 = vmul.f32 %v677, %v687
      %v691 = vmul.f32 %v680, %v687
      %v692 = vsub.f32 %v662, %v688
      %v693 = vsub.f32 %v663, %v689
      %v694 = vsub.f32 %v664, %v690
      %v695 = vsub.f32 %v665, %v691
      %v696 = vmul.f32 %v692, %v692
      %v697 = vmul.f32 %v693, %v693
      %v698 = vmul.f32 %v694, %v694
      %v699 = vmul.f32 %v695, %v695
      %v700 = vsel %vm668, %v696, 0.0
      %701 = vadd.xlane.f32.xlu0 %v700
      %v702 = vpop.xlane.xlu0 %701
      %v703 = vsel %vm668, %v697, 0.0
      %704 = vadd.xlane.f32.xlu0 %v703
      %v705 = vpop.xlane.xlu0 %704
      %v706 = vsel %vm668, %v698, 0.0
      %707 = vadd.xlane.f32.xlu0 %v706
      %v708 = vpop.xlane.xlu0 %707
      %v709 = vsel %vm668, %v699, 0.0
      %710 = vadd.xlane.f32.xlu0 %v709
      %v711 = vpop.xlane.xlu0 %710
      %v712 = vmul.f32 %v702, %v687
      %v713 = vmul.f32 %v705, %v687
      %v714 = vmul.f32 %v708, %v687
      %v715 = vmul.f32 %v711, %v687
      %v716 = vadd.f32 %v712, 1e-05
      %v717 = vadd.f32 %v713, 1e-05
      %v718 = vadd.f32 %v714, 1e-05
      %v719 = vadd.f32 %v715, 1e-05
      %v720 = vrsqrt.pop %v716
      %v721 = vmul.f32 %v720, %v716
      %v722 = vmul.f32 %v721, %v720
      %v723 = vmul.f32 0.5, %v722
      %v724 = vsub.f32 1.5, %v723
      %v725 = vmul.f32 %v720, %v724
      %vm726 = vweird.f32 %v716
      %vm727 = vweird.f32 %v720
      %vm728 = vmor %vm726, %vm727
      %v729 = vsel %vm728, %v720, %v725
      %v730 = vrsqrt.pop %v717
      %v731 = vmul.f32 %v730, %v717
      %v732 = vmul.f32 %v731, %v730
      %v733 = vmul.f32 0.5, %v732
      %v734 = vsub.f32 1.5, %v733
      %v735 = vmul.f32 %v730, %v734
      %vm736 = vweird.f32 %v717
      %vm737 = vweird.f32 %v730
      %vm738 = vmor %vm736, %vm737
      %v739 = vsel %vm738, %v730, %v735
      %v740 = vrsqrt.pop %v718
      %v741 = vmul.f32 %v740, %v718
      %v742 = vmul.f32 %v741, %v740
      %v743 = vmul.f32 0.5, %v742
      %v744 = vsub.f32 1.5, %v743
      %v745 = vmul.f32 %v740, %v744
      %vm746 = vweird.f32 %v718
      %vm747 = vweird.f32 %v740
      %vm748 = vmor %vm746, %vm747
      %v749 = vsel %vm748, %v740, %v745
      %v750 = vrsqrt.pop %v719
      %v751 = vmul.f32 %v750, %v719
      %v752 = vmul.f32 %v751, %v750
      %v753 = vmul.f32 0.5, %v752
      %v754 = vsub.f32 1.5, %v753
      %v755 = vmul.f32 %v750, %v754
      %vm756 = vweird.f32 %v719
      %vm757 = vweird.f32 %v750
      %vm758 = vmor %vm756, %vm757
      %v759 = vsel %vm758, %v750, %v755
      %v760 = vmul.f32 %v692, %v729
      %v761 = vmul.f32 %v693, %v739
      %v762 = vmul.f32 %v694, %v749
      %v763 = vmul.f32 %v695, %v759
      %v765 = vperm.slane %v666, 0
      %v767 = vmul.f32 %v760, %v765
      %v768 = vmul.f32 %v761, %v765
      %v769 = vmul.f32 %v762, %v765
      %v770 = vmul.f32 %v763, %v765
      %v772 = vperm.slane %v667, 0
      %v774 = vadd.f32 %v767, %v772
      %v775 = vadd.f32 %v768, %v772
      %v776 = vadd.f32 %v769, %v772
      %v777 = vadd.f32 %v770, %v772
      %v778 = vpack.c.bf16 %v775, %v774
      %v779 = vpack.c.bf16 %v777, %v776
      %v780 = vld [vmem:[%s608] sm:$0xf]
      %v781 = vld [vmem:[%s608 + $0x4] sm:$0xf]
      %v782 = vld [vmem:[%s608 + $0x8] sm:$0xf]
      %v783 = vld [vmem:[%s608 + $0xc] sm:$0xf]
      %v784 = vld [vmem:[%s611] sm:$0x1]
      %v786 = vperm.slane %v784, 0
      %v792 = vunpack.c.l.b16 %v780
      %v793 = vunpack.c.l.b16 %v781
      %v794 = vunpack.c.l.b16 %v782
      %v795 = vunpack.c.l.b16 %v783
      %v796 = vpack.c.b16 %v793, %v792
      %v797 = vpack.c.b16 %v795, %v794
      %v801 = vsel %vm668, %v778, 0
      %v804 = vsel %vm668, %v779, 0
      %806 = vmatpush.bf16.msra.mxu0 0
      %807 = vmatpush.bf16.msra.mxu0 0
      %808 = vmatpush.bf16.msra.mxu0 0
      %809 = vmatpush.bf16.msra.mxu0 0
      %810 = vmatpush.bf16.msra.mxu0 0
      %811 = vmatpush.bf16.msra.mxu0 0
      %812 = vmatpush.bf16.msra.mxu0 %v797
      %813 = vmatpush.bf16.msra.mxu0 %v796
      %814 = vmatmul.bf16.gmra.mxu0 %v801
      %v815 = vpop.f32.mrf.mxu0
      %v816 = vadd.f32 %v786, %v815
      %v817 = vpop.f32.mrf.mxu0
      %v818 = vadd.f32 %v786, %v817
      %819 = vmatmul.bf16.gmra.mxu0 %v804
      %v820 = vpop.f32.mrf.mxu0
      %v821 = vadd.f32 %v786, %v820
      %v822 = vpop.f32.mrf.mxu0
      %v823 = vadd.f32 %v786, %v822
      %824 = vdwg.mxu0
      %v825 = vmul.f32 %v816, 0.35355338
      %v826 = vmul.f32 %v818, 0.35355338
      %v827 = vpack.c.bf16 %v826, %v825
      %v828 = vpack.c.bf16 %v818, %v816
      %830 = vrot.lane.b32.xlu0 %v828, 96
      %v831 = vpop.permute.xlu0 %830
      %vm832 = vcmask 64512
      %v834 = vsel %vm832, %v827, 0
      %v837 = vsel %vm832, %v831, 0
      %839 = vmatpush.bf16.xpose.msra.mxu0 0
      %840 = vmatpush.bf16.xpose.msra.mxu0 0
      %841 = vmatpush.bf16.xpose.msra.mxu0 0
      %842 = vmatpush.bf16.xpose.msra.mxu0 0
      %843 = vmatpush.bf16.xpose.msra.mxu0 0
      %844 = vmatpush.bf16.xpose.msra.mxu0 0
      %845 = vmatpush.bf16.xpose.msra.mxu0 0
      %846 = vmatpush.bf16.xpose.msra.mxu0 %v837
      %847 = vmatmul.bf16.gmra.mxu0 %v834
      %v848 = vpop.f32.mrf.mxu0
      %v849 = vadd.f32 0.0, %v848
      %v850 = vpop.f32.mrf.mxu0
      %v851 = vadd.f32 0.0, %v850
      %852 = vdwg.mxu0
      %vm853 = vcmask 130048
      %v854 = vsel %vm853, %v849, -inf
      %855 = vmax.xlane.f32.xlu0 %v854
      %v856 = vpop.xlane.xlu0 %855
      %v857 = vsel %vm853, %v851, -inf
      %858 = vmax.xlane.f32.xlu0 %v857
      %v859 = vpop.xlane.xlu0 %858
      %v860 = vsub.f32 %v849, %v856
      %v861 = vsub.f32 %v851, %v859
      %v862 = vmul.f32 %v860, 1.442695
      %v863 = vpow.pop %v862
      %v864 = vmul.f32 %v861, 1.442695
      %v865 = vpow.pop %v864
      %v866 = vsel %vm853, %v863, 0.0
      %867 = vadd.xlane.f32.xlu0 %v866
      %v868 = vpop.xlane.xlu0 %867
      %v869 = vsel %vm853, %v865, 0.0
      %870 = vadd.xlane.f32.xlu0 %v869
      %v871 = vpop.xlane.xlu0 %870
      %v872 = vrcp.pop %v868
      %v873 = vrcp.pop %v871
      %v874 = vmul.f32 %v863, %v872
      %v875 = vmul.f32 %v865, %v873
      %v876 = vpack.c.bf16 %v875, %v874
      %877 = vrot.lane.b32.xlu0 %v828, 64
      %v878 = vpop.permute.xlu0 %877
      %v881 = vsel %vm853, %v876, 0
      %883 = vmatpush.bf16.msra.mxu0 0
      %884 = vmatpush.bf16.msra.mxu0 0
      %885 = vmatpush.bf16.msra.mxu0 0
      %886 = vmatpush.bf16.msra.mxu0 0
      %887 = vmatpush.bf16.msra.mxu0 0
      %888 = vmatpush.bf16.msra.mxu0 0
      %889 = vmatpush.bf16.msra.mxu0 0
      %890 = vmatpush.bf16.msra.mxu0 %v878
      %891 = vmatmul.bf16.gmra.mxu0 %v881
      %v892 = vpop.f32.mrf.mxu0
      %v893 = vadd.f32 0.0, %v892
      %v894 = vpop.f32.mrf.mxu0
      %v895 = vadd.f32 0.0, %v894
      %896 = vdwg.mxu0
      %898 = vrot.lane.b32.xlu0 %v827, 120
      %v899 = vpop.permute.xlu0 %898
      %900 = vrot.lane.b32.xlu0 %v828, 88
      %v901 = vpop.permute.xlu0 %900
      %v903 = vsel %vm832, %v899, 0
      %v906 = vsel %vm832, %v901, 0
      %908 = vmatpush.bf16.xpose.msra.mxu0 0
      %909 = vmatpush.bf16.xpose.msra.mxu0 0
      %910 = vmatpush.bf16.xpose.msra.mxu0 0
      %911 = vmatpush.bf16.xpose.msra.mxu0 0
      %912 = vmatpush.bf16.xpose.msra.mxu0 0
      %913 = vmatpush.bf16.xpose.msra.mxu0 0
      %914 = vmatpush.bf16.xpose.msra.mxu0 0
      %915 = vmatpush.bf16.xpose.msra.mxu0 %v906
      %916 = vmatmul.bf16.gmra.mxu0 %v903
      %v917 = vpop.f32.mrf.mxu0
      %v918 = vadd.f32 0.0, %v917
      %v919 = vpop.f32.mrf.mxu0
      %v920 = vadd.f32 0.0, %v919
      %921 = vdwg.mxu0
      %v922 = vsel %vm853, %v918, -inf
      %923 = vmax.xlane.f32.xlu0 %v922
      %v924 = vpop.xlane.xlu0 %923
      %v925 = vsel %vm853, %v920, -inf
      %926 = vmax.xlane.f32.xlu0 %v925
      %v927 = vpop.xlane.xlu0 %926
      %v928 = vsub.f32 %v918, %v924
      %v929 = vsub.f32 %v920, %v927
      %v930 = vmul.f32 %v928, 1.442695
      %v931 = vpow.pop %v930
      %v932 = vmul.f32 %v929, 1.442695
      %v933 = vpow.pop %v932
      %v934 = vsel %vm853, %v931, 0.0
      %935 = vadd.xlane.f32.xlu0 %v934
      %v936 = vpop.xlane.xlu0 %935
      %v937 = vsel %vm853, %v933, 0.0
      %938 = vadd.xlane.f32.xlu0 %v937
      %v939 = vpop.xlane.xlu0 %938
      %v940 = vrcp.pop %v936
      %v941 = vrcp.pop %v939
      %v942 = vmul.f32 %v931, %v940
      %v943 = vmul.f32 %v933, %v941
      %v944 = vpack.c.bf16 %v943, %v942
      %945 = vrot.lane.b32.xlu0 %v828, 56
      %v946 = vpop.permute.xlu0 %945
      %v949 = vsel %vm853, %v944, 0
      %951 = vmatpush.bf16.msra.mxu0 0
      %952 = vmatpush.bf16.msra.mxu0 0
      %953 = vmatpush.bf16.msra.mxu0 0
      %954 = vmatpush.bf16.msra.mxu0 0
      %955 = vmatpush.bf16.msra.mxu0 0
      %956 = vmatpush.bf16.msra.mxu0 0
      %957 = vmatpush.bf16.msra.mxu0 0
      %958 = vmatpush.bf16.msra.mxu0 %v946
      %959 = vmatmul.bf16.gmra.mxu0 %v949
      %v960 = vpop.f32.mrf.mxu0
      %v961 = vadd.f32 0.0, %v960
      %v962 = vpop.f32.mrf.mxu0
      %v963 = vadd.f32 0.0, %v962
      %964 = vdwg.mxu0
      %965 = vrot.lane.b32.xlu0 %v827, 112
      %v966 = vpop.permute.xlu0 %965
      %967 = vrot.lane.b32.xlu0 %v828, 80
      %v968 = vpop.permute.xlu0 %967
      %v970 = vsel %vm832, %v966, 0
      %v973 = vsel %vm832, %v968, 0
      %975 = vmatpush.bf16.xpose.msra.mxu0 0
      %976 = vmatpush.bf16.xpose.msra.mxu0 0
      %977 = vmatpush.bf16.xpose.msra.mxu0 0
      %978 = vmatpush.bf16.xpose.msra.mxu0 0
      %979 = vmatpush.bf16.xpose.msra.mxu0 0
      %980 = vmatpush.bf16.xpose.msra.mxu0 0
      %981 = vmatpush.bf16.xpose.msra.mxu0 0
      %982 = vmatpush.bf16.xpose.msra.mxu0 %v973
      %983 = vmatmul.bf16.gmra.mxu0 %v970
      %v984 = vpop.f32.mrf.mxu0
      %v985 = vadd.f32 0.0, %v984
      %v986 = vpop.f32.mrf.mxu0
      %v987 = vadd.f32 0.0, %v986
      %988 = vdwg.mxu0
      %v989 = vsel %vm853, %v985, -inf
      %990 = vmax.xlane.f32.xlu0 %v989
      %v991 = vpop.xlane.xlu0 %990
      %v992 = vsel %vm853, %v987, -inf
      %993 = vmax.xlane.f32.xlu0 %v992
      %v994 = vpop.xlane.xlu0 %993
      %v995 = vsub.f32 %v985, %v991
      %v996 = vsub.f32 %v987, %v994
      %v997 = vmul.f32 %v995, 1.442695
      %v998 = vpow.pop %v997
      %v999 = vmul.f32 %v996, 1.442695
      %v1000 = vpow.pop %v999
      %v1001 = vsel %vm853, %v998, 0.0
      %1002 = vadd.xlane.f32.xlu0 %v1001
      %v1003 = vpop.xlane.xlu0 %1002
      %v1004 = vsel %vm853, %v1000, 0.0
      %1005 = vadd.xlane.f32.xlu0 %v1004
      %v1006 = vpop.xlane.xlu0 %1005
      %v1007 = vrcp.pop %v1003
      %v1008 = vrcp.pop %v1006
      %v1009 = vmul.f32 %v998, %v1007
      %v1010 = vmul.f32 %v1000, %v1008
      %v1011 = vpack.c.bf16 %v1010, %v1009
      %1012 = vrot.lane.b32.xlu0 %v828, 48
      %v1013 = vpop.permute.xlu0 %1012
      %v1016 = vsel %vm853, %v1011, 0
      %1018 = vmatpush.bf16.msra.mxu0 0
      %1019 = vmatpush.bf16.msra.mxu0 0
      %1020 = vmatpush.bf16.msra.mxu0 0
      %1021 = vmatpush.bf16.msra.mxu0 0
      %1022 = vmatpush.bf16.msra.mxu0 0
      %1023 = vmatpush.bf16.msra.mxu0 0
      %1024 = vmatpush.bf16.msra.mxu0 0
      %1025 = vmatpush.bf16.msra.mxu0 %v1013
      %1026 = vmatmul.bf16.gmra.mxu0 %v1016
      %v1027 = vpop.f32.mrf.mxu0
      %v1028 = vadd.f32 0.0, %v1027
      %v1029 = vpop.f32.mrf.mxu0
      %v1030 = vadd.f32 0.0, %v1029
      %1031 = vdwg.mxu0
      %1032 = vrot.lane.b32.xlu0 %v827, 104
      %v1033 = vpop.permute.xlu0 %1032
      %1034 = vrot.lane.b32.xlu0 %v828, 72
      %v1035 = vpop.permute.xlu0 %1034
      %v1037 = vsel %vm832, %v1033, 0
      %v1040 = vsel %vm832, %v1035, 0
      %1042 = vmatpush.bf16.xpose.msra.mxu0 0
      %1043 = vmatpush.bf16.xpose.msra.mxu0 0
      %1044 = vmatpush.bf16.xpose.msra.mxu0 0
      %1045 = vmatpush.bf16.xpose.msra.mxu0 0
      %1046 = vmatpush.bf16.xpose.msra.mxu0 0
      %1047 = vmatpush.bf16.xpose.msra.mxu0 0
      %1048 = vmatpush.bf16.xpose.msra.mxu0 0
      %1049 = vmatpush.bf16.xpose.msra.mxu0 %v1040
      %1050 = vmatmul.bf16.gmra.mxu0 %v1037
      %v1051 = vpop.f32.mrf.mxu0
      %v1052 = vadd.f32 0.0, %v1051
      %v1053 = vpop.f32.mrf.mxu0
      %v1054 = vadd.f32 0.0, %v1053
      %1055 = vdwg.mxu0
      %v1056 = vsel %vm853, %v1052, -inf
      %1057 = vmax.xlane.f32.xlu0 %v1056
      %v1058 = vpop.xlane.xlu0 %1057
      %v1059 = vsel %vm853, %v1054, -inf
      %1060 = vmax.xlane.f32.xlu0 %v1059
      %v1061 = vpop.xlane.xlu0 %1060
      %v1062 = vsub.f32 %v1052, %v1058
      %v1063 = vsub.f32 %v1054, %v1061
      %v1064 = vmul.f32 %v1062, 1.442695
      %v1065 = vpow.pop %v1064
      %v1066 = vmul.f32 %v1063, 1.442695
      %v1067 = vpow.pop %v1066
      %v1068 = vsel %vm853, %v1065, 0.0
      %1069 = vadd.xlane.f32.xlu0 %v1068
      %v1070 = vpop.xlane.xlu0 %1069
      %v1071 = vsel %vm853, %v1067, 0.0
      %1072 = vadd.xlane.f32.xlu0 %v1071
      %v1073 = vpop.xlane.xlu0 %1072
      %v1074 = vrcp.pop %v1070
      %v1075 = vrcp.pop %v1073
      %v1076 = vmul.f32 %v1065, %v1074
      %v1077 = vmul.f32 %v1067, %v1075
      %v1078 = vpack.c.bf16 %v1077, %v1076
      %1079 = vrot.lane.b32.xlu0 %v828, 40
      %v1080 = vpop.permute.xlu0 %1079
      %v1083 = vsel %vm853, %v1078, 0
      %1085 = vmatpush.bf16.msra.mxu0 0
      %1086 = vmatpush.bf16.msra.mxu0 0
      %1087 = vmatpush.bf16.msra.mxu0 0
      %1088 = vmatpush.bf16.msra.mxu0 0
      %1089 = vmatpush.bf16.msra.mxu0 0
      %1090 = vmatpush.bf16.msra.mxu0 0
      %1091 = vmatpush.bf16.msra.mxu0 0
      %1092 = vmatpush.bf16.msra.mxu0 %v1080
      %1093 = vmatmul.bf16.gmra.mxu0 %v1083
      %v1094 = vpop.f32.mrf.mxu0
      %v1095 = vadd.f32 0.0, %v1094
      %v1096 = vpop.f32.mrf.mxu0
      %v1097 = vadd.f32 0.0, %v1096
      %1098 = vdwg.mxu0
      %1101 = vrot.lane.b32.xlu0 %v961, 8
      %v1102 = vpop.permute.xlu0 %1101
      %1103 = vrot.lane.b32.xlu0 %v963, 8
      %v1104 = vpop.permute.xlu0 %1103
      %1109 = vrot.lane.b32.xlu0 %v1028, 16
      %v1110 = vpop.permute.xlu0 %1109
      %1111 = vrot.lane.b32.xlu0 %v1030, 16
      %v1112 = vpop.permute.xlu0 %1111
      %1117 = vrot.lane.b32.xlu0 %v1095, 24
      %v1118 = vpop.permute.xlu0 %1117
      %1119 = vrot.lane.b32.xlu0 %v1097, 24
      %v1120 = vpop.permute.xlu0 %1119
      %v1123 = vsel %vm832, %v893, %v1102
      %v1124 = vsel %vm832, %v895, %v1104
      %v1125 = vsel %vm853, %v1123, %v1110
      %v1126 = vsel %vm853, %v1124, %v1112
      %vm1127 = vcmask 195584
      %v1128 = vsel %vm1127, %v1125, %v1118
      %v1129 = vsel %vm1127, %v1126, %v1120
      %v1130 = vmul.f32 %v821, 0.35355338
      %v1131 = vmul.f32 %v823, 0.35355338
      %v1132 = vpack.c.bf16 %v1131, %v1130
      %v1133 = vpack.c.bf16 %v823, %v821
      %1135 = vrot.lane.b32.xlu0 %v1133, 96
      %v1136 = vpop.permute.xlu0 %1135
      %v1138 = vsel %vm832, %v1132, 0
      %v1141 = vsel %vm832, %v1136, 0
      %1143 = vmatpush.bf16.xpose.msra.mxu0 0
      %1144 = vmatpush.bf16.xpose.msra.mxu0 0
      %1145 = vmatpush.bf16.xpose.msra.mxu0 0
      %1146 = vmatpush.bf16.xpose.msra.mxu0 0
      %1147 = vmatpush.bf16.xpose.msra.mxu0 0
      %1148 = vmatpush.bf16.xpose.msra.mxu0 0
      %1149 = vmatpush.bf16.xpose.msra.mxu0 0
      %1150 = vmatpush.bf16.xpose.msra.mxu0 %v1141
      %1151 = vmatmul.bf16.gmra.mxu0 %v1138
      %v1152 = vpop.f32.mrf.mxu0
      %v1153 = vadd.f32 0.0, %v1152
      %v1154 = vpop.f32.mrf.mxu0
      %v1155 = vadd.f32 0.0, %v1154
      %1156 = vdwg.mxu0
      %v1157 = vsel %vm853, %v1153, -inf
      %1158 = vmax.xlane.f32.xlu0 %v1157
      %v1159 = vpop.xlane.xlu0 %1158
      %v1160 = vsel %vm853, %v1155, -inf
      %1161 = vmax.xlane.f32.xlu0 %v1160
      %v1162 = vpop.xlane.xlu0 %1161
      %v1163 = vsub.f32 %v1153, %v1159
      %v1164 = vsub.f32 %v1155, %v1162
      %v1165 = vmul.f32 %v1163, 1.442695
      %v1166 = vpow.pop %v1165
      %v1167 = vmul.f32 %v1164, 1.442695
      %v1168 = vpow.pop %v1167
      %v1169 = vsel %vm853, %v1166, 0.0
      %1170 = vadd.xlane.f32.xlu0 %v1169
      %v1171 = vpop.xlane.xlu0 %1170
      %v1172 = vsel %vm853, %v1168, 0.0
      %1173 = vadd.xlane.f32.xlu0 %v1172
      %v1174 = vpop.xlane.xlu0 %1173
      %v1175 = vrcp.pop %v1171
      %v1176 = vrcp.pop %v1174
      %v1177 = vmul.f32 %v1166, %v1175
      %v1178 = vmul.f32 %v1168, %v1176
      %v1179 = vpack.c.bf16 %v1178, %v1177
      %1180 = vrot.lane.b32.xlu0 %v1133, 64
      %v1181 = vpop.permute.xlu0 %1180
      %v1184 = vsel %vm853, %v1179, 0
      %1186 = vmatpush.bf16.msra.mxu0 0
      %1187 = vmatpush.bf16.msra.mxu0 0
      %1188 = vmatpush.bf16.msra.mxu0 0
      %1189 = vmatpush.bf16.msra.mxu0 0
      %1190 = vmatpush.bf16.msra.mxu0 0
      %1191 = vmatpush.bf16.msra.mxu0 0
      %1192 = vmatpush.bf16.msra.mxu0 0
      %1193 = vmatpush.bf16.msra.mxu0 %v1181
      %1194 = vmatmul.bf16.gmra.mxu0 %v1184
      %v1195 = vpop.f32.mrf.mxu0
      %v1196 = vadd.f32 0.0, %v1195
      %v1197 = vpop.f32.mrf.mxu0
      %v1198 = vadd.f32 0.0, %v1197
      %1199 = vdwg.mxu0
      %1201 = vrot.lane.b32.xlu0 %v1132, 120
      %v1202 = vpop.permute.xlu0 %1201
      %1203 = vrot.lane.b32.xlu0 %v1133, 88
      %v1204 = vpop.permute.xlu0 %1203
      %v1206 = vsel %vm832, %v1202, 0
      %v1209 = vsel %vm832, %v1204, 0
      %1211 = vmatpush.bf16.xpose.msra.mxu0 0
      %1212 = vmatpush.bf16.xpose.msra.mxu0 0
      %1213 = vmatpush.bf16.xpose.msra.mxu0 0
      %1214 = vmatpush.bf16.xpose.msra.mxu0 0
      %1215 = vmatpush.bf16.xpose.msra.mxu0 0
      %1216 = vmatpush.bf16.xpose.msra.mxu0 0
      %1217 = vmatpush.bf16.xpose.msra.mxu0 0
      %1218 = vmatpush.bf16.xpose.msra.mxu0 %v1209
      %1219 = vmatmul.bf16.gmra.mxu0 %v1206
      %v1220 = vpop.f32.mrf.mxu0
      %v1221 = vadd.f32 0.0, %v1220
      %v1222 = vpop.f32.mrf.mxu0
      %v1223 = vadd.f32 0.0, %v1222
      %1224 = vdwg.mxu0
      %v1225 = vsel %vm853, %v1221, -inf
      %1226 = vmax.xlane.f32.xlu0 %v1225
      %v1227 = vpop.xlane.xlu0 %1226
      %v1228 = vsel %vm853, %v1223, -inf
      %1229 = vmax.xlane.f32.xlu0 %v1228
      %v1230 = vpop.xlane.xlu0 %1229
      %v1231 = vsub.f32 %v1221, %v1227
      %v1232 = vsub.f32 %v1223, %v1230
      %v1233 = vmul.f32 %v1231, 1.442695
      %v1234 = vpow.pop %v1233
      %v1235 = vmul.f32 %v1232, 1.442695
      %v1236 = vpow.pop %v1235
      %v1237 = vsel %vm853, %v1234, 0.0
      %1238 = vadd.xlane.f32.xlu0 %v1237
      %v1239 = vpop.xlane.xlu0 %1238
      %v1240 = vsel %vm853, %v1236, 0.0
      %1241 = vadd.xlane.f32.xlu0 %v1240
      %v1242 = vpop.xlane.xlu0 %1241
      %v1243 = vrcp.pop %v1239
      %v1244 = vrcp.pop %v1242
      %v1245 = vmul.f32 %v1234, %v1243
      %v1246 = vmul.f32 %v1236, %v1244
      %v1247 = vpack.c.bf16 %v1246, %v1245
      %1248 = vrot.lane.b32.xlu0 %v1133, 56
      %v1249 = vpop.permute.xlu0 %1248
      %v1252 = vsel %vm853, %v1247, 0
      %1254 = vmatpush.bf16.msra.mxu0 0
      %1255 = vmatpush.bf16.msra.mxu0 0
      %1256 = vmatpush.bf16.msra.mxu0 0
      %1257 = vmatpush.bf16.msra.mxu0 0
      %1258 = vmatpush.bf16.msra.mxu0 0
      %1259 = vmatpush.bf16.msra.mxu0 0
      %1260 = vmatpush.bf16.msra.mxu0 0
      %1261 = vmatpush.bf16.msra.mxu0 %v1249
      %1262 = vmatmul.bf16.gmra.mxu0 %v1252
      %v1263 = vpop.f32.mrf.mxu0
      %v1264 = vadd.f32 0.0, %v1263
      %v1265 = vpop.f32.mrf.mxu0
      %v1266 = vadd.f32 0.0, %v1265
      %1267 = vdwg.mxu0
      %1268 = vrot.lane.b32.xlu0 %v1132, 112
      %v1269 = vpop.permute.xlu0 %1268
      %1270 = vrot.lane.b32.xlu0 %v1133, 80
      %v1271 = vpop.permute.xlu0 %1270
      %v1273 = vsel %vm832, %v1269, 0
      %v1276 = vsel %vm832, %v1271, 0
      %1278 = vmatpush.bf16.xpose.msra.mxu0 0
      %1279 = vmatpush.bf16.xpose.msra.mxu0 0
      %1280 = vmatpush.bf16.xpose.msra.mxu0 0
      %1281 = vmatpush.bf16.xpose.msra.mxu0 0
      %1282 = vmatpush.bf16.xpose.msra.mxu0 0
      %1283 = vmatpush.bf16.xpose.msra.mxu0 0
      %1284 = vmatpush.bf16.xpose.msra.mxu0 0
      %1285 = vmatpush.bf16.xpose.msra.mxu0 %v1276
      %1286 = vmatmul.bf16.gmra.mxu0 %v1273
      %v1287 = vpop.f32.mrf.mxu0
      %v1288 = vadd.f32 0.0, %v1287
      %v1289 = vpop.f32.mrf.mxu0
      %v1290 = vadd.f32 0.0, %v1289
      %1291 = vdwg.mxu0
      %v1292 = vsel %vm853, %v1288, -inf
      %1293 = vmax.xlane.f32.xlu0 %v1292
      %v1294 = vpop.xlane.xlu0 %1293
      %v1295 = vsel %vm853, %v1290, -inf
      %1296 = vmax.xlane.f32.xlu0 %v1295
      %v1297 = vpop.xlane.xlu0 %1296
      %v1298 = vsub.f32 %v1288, %v1294
      %v1299 = vsub.f32 %v1290, %v1297
      %v1300 = vmul.f32 %v1298, 1.442695
      %v1301 = vpow.pop %v1300
      %v1302 = vmul.f32 %v1299, 1.442695
      %v1303 = vpow.pop %v1302
      %v1304 = vsel %vm853, %v1301, 0.0
      %1305 = vadd.xlane.f32.xlu0 %v1304
      %v1306 = vpop.xlane.xlu0 %1305
      %v1307 = vsel %vm853, %v1303, 0.0
      %1308 = vadd.xlane.f32.xlu0 %v1307
      %v1309 = vpop.xlane.xlu0 %1308
      %v1310 = vrcp.pop %v1306
      %v1311 = vrcp.pop %v1309
      %v1312 = vmul.f32 %v1301, %v1310
      %v1313 = vmul.f32 %v1303, %v1311
      %v1314 = vpack.c.bf16 %v1313, %v1312
      %1315 = vrot.lane.b32.xlu0 %v1133, 48
      %v1316 = vpop.permute.xlu0 %1315
      %v1319 = vsel %vm853, %v1314, 0
      %1321 = vmatpush.bf16.msra.mxu0 0
      %1322 = vmatpush.bf16.msra.mxu0 0
      %1323 = vmatpush.bf16.msra.mxu0 0
      %1324 = vmatpush.bf16.msra.mxu0 0
      %1325 = vmatpush.bf16.msra.mxu0 0
      %1326 = vmatpush.bf16.msra.mxu0 0
      %1327 = vmatpush.bf16.msra.mxu0 0
      %1328 = vmatpush.bf16.msra.mxu0 %v1316
      %1329 = vmatmul.bf16.gmra.mxu0 %v1319
      %v1330 = vpop.f32.mrf.mxu0
      %v1331 = vadd.f32 0.0, %v1330
      %v1332 = vpop.f32.mrf.mxu0
      %v1333 = vadd.f32 0.0, %v1332
      %1334 = vdwg.mxu0
      %1335 = vrot.lane.b32.xlu0 %v1132, 104
      %v1336 = vpop.permute.xlu0 %1335
      %1337 = vrot.lane.b32.xlu0 %v1133, 72
      %v1338 = vpop.permute.xlu0 %1337
      %v1340 = vsel %vm832, %v1336, 0
      %v1343 = vsel %vm832, %v1338, 0
      %1345 = vmatpush.bf16.xpose.msra.mxu0 0
      %1346 = vmatpush.bf16.xpose.msra.mxu0 0
      %1347 = vmatpush.bf16.xpose.msra.mxu0 0
      %1348 = vmatpush.bf16.xpose.msra.mxu0 0
      %1349 = vmatpush.bf16.xpose.msra.mxu0 0
      %1350 = vmatpush.bf16.xpose.msra.mxu0 0
      %1351 = vmatpush.bf16.xpose.msra.mxu0 0
      %1352 = vmatpush.bf16.xpose.msra.mxu0 %v1343
      %1353 = vmatmul.bf16.gmra.mxu0 %v1340
      %v1354 = vpop.f32.mrf.mxu0
      %v1355 = vadd.f32 0.0, %v1354
      %v1356 = vpop.f32.mrf.mxu0
      %v1357 = vadd.f32 0.0, %v1356
      %1358 = vdwg.mxu0
      %v1359 = vsel %vm853, %v1355, -inf
      %1360 = vmax.xlane.f32.xlu0 %v1359
      %v1361 = vpop.xlane.xlu0 %1360
      %v1362 = vsel %vm853, %v1357, -inf
      %1363 = vmax.xlane.f32.xlu0 %v1362
      %v1364 = vpop.xlane.xlu0 %1363
      %v1365 = vsub.f32 %v1355, %v1361
      %v1366 = vsub.f32 %v1357, %v1364
      %v1367 = vmul.f32 %v1365, 1.442695
      %v1368 = vpow.pop %v1367
      %v1369 = vmul.f32 %v1366, 1.442695
      %v1370 = vpow.pop %v1369
      %v1371 = vsel %vm853, %v1368, 0.0
      %1372 = vadd.xlane.f32.xlu0 %v1371
      %v1373 = vpop.xlane.xlu0 %1372
      %v1374 = vsel %vm853, %v1370, 0.0
      %1375 = vadd.xlane.f32.xlu0 %v1374
      %v1376 = vpop.xlane.xlu0 %1375
      %v1377 = vrcp.pop %v1373
      %v1378 = vrcp.pop %v1376
      %v1379 = vmul.f32 %v1368, %v1377
      %v1380 = vmul.f32 %v1370, %v1378
      %v1381 = vpack.c.bf16 %v1380, %v1379
      %1382 = vrot.lane.b32.xlu0 %v1133, 40
      %v1383 = vpop.permute.xlu0 %1382
      %v1386 = vsel %vm853, %v1381, 0
      %1388 = vmatpush.bf16.msra.mxu0 0
      %1389 = vmatpush.bf16.msra.mxu0 0
      %1390 = vmatpush.bf16.msra.mxu0 0
      %1391 = vmatpush.bf16.msra.mxu0 0
      %1392 = vmatpush.bf16.msra.mxu0 0
      %1393 = vmatpush.bf16.msra.mxu0 0
      %1394 = vmatpush.bf16.msra.mxu0 0
      %1395 = vmatpush.bf16.msra.mxu0 %v1383
      %1396 = vmatmul.bf16.gmra.mxu0 %v1386
      %v1397 = vpop.f32.mrf.mxu0
      %v1398 = vadd.f32 0.0, %v1397
      %v1399 = vpop.f32.mrf.mxu0
      %v1400 = vadd.f32 0.0, %v1399
      %1401 = vdwg.mxu0
      %1404 = vrot.lane.b32.xlu0 %v1264, 8
      %v1405 = vpop.permute.xlu0 %1404
      %1406 = vrot.lane.b32.xlu0 %v1266, 8
      %v1407 = vpop.permute.xlu0 %1406
      %1412 = vrot.lane.b32.xlu0 %v1331, 16
      %v1413 = vpop.permute.xlu0 %1412
      %1414 = vrot.lane.b32.xlu0 %v1333, 16
      %v1415 = vpop.permute.xlu0 %1414
      %1420 = vrot.lane.b32.xlu0 %v1398, 24
      %v1421 = vpop.permute.xlu0 %1420
      %1422 = vrot.lane.b32.xlu0 %v1400, 24
      %v1423 = vpop.permute.xlu0 %1422
      %v1426 = vsel %vm832, %v1196, %v1405
      %v1427 = vsel %vm832, %v1198, %v1407
      %v1428 = vsel %vm853, %v1426, %v1413
      %v1429 = vsel %vm853, %v1427, %v1415
      %v1430 = vsel %vm1127, %v1428, %v1421
      %v1431 = vsel %vm1127, %v1429, %v1423
      %v1432 = vpack.c.bf16 %v1129, %v1128
      %v1433 = vpack.c.bf16 %v1431, %v1430
      %v1434 = vld [vmem:[%s616] sm:$0xf]
      %v1435 = vld [vmem:[%s616 + $0x4] sm:$0xf]
      %v1436 = vld [vmem:[%s616 + $0x8] sm:$0xf]
      %v1437 = vld [vmem:[%s616 + $0xc] sm:$0xf]
      %v1442 = vunpack.c.l.b16 %v1434
      %v1443 = vunpack.c.l.b16 %v1435
      %v1444 = vunpack.c.l.b16 %v1436
      %v1445 = vunpack.c.l.b16 %v1437
      %v1446 = vpack.c.b16 %v1443, %v1442
      %v1447 = vpack.c.b16 %v1445, %v1444
      %v1451 = vsel %vm668, %v1432, 0
      %v1454 = vsel %vm668, %v1433, 0
      %1456 = vmatpush.bf16.msra.mxu0 0
      %1457 = vmatpush.bf16.msra.mxu0 0
      %1458 = vmatpush.bf16.msra.mxu0 0
      %1459 = vmatpush.bf16.msra.mxu0 0
      %1460 = vmatpush.bf16.msra.mxu0 0
      %1461 = vmatpush.bf16.msra.mxu0 0
      %1462 = vmatpush.bf16.msra.mxu0 %v1447
      %1463 = vmatpush.bf16.msra.mxu0 %v1446
      %1464 = vmatmul.bf16.gmra.mxu0 %v1451
      %v1465 = vpop.f32.mrf.mxu0
      %v1466 = vadd.f32 0.0, %v1465
      %v1467 = vpop.f32.mrf.mxu0
      %v1468 = vadd.f32 0.0, %v1467
      %1469 = vmatmul.bf16.gmra.mxu0 %v1454
      %v1470 = vpop.f32.mrf.mxu0
      %v1471 = vadd.f32 0.0, %v1470
      %v1472 = vpop.f32.mrf.mxu0
      %v1473 = vadd.f32 0.0, %v1472
      %1474 = vdwg.mxu0
      %v1475 = vadd.f32 %v662, %v1466
      %v1476 = vadd.f32 %v663, %v1468
      %v1477 = vadd.f32 %v664, %v1471
      %v1478 = vadd.f32 %v665, %v1473
      %v1479 = vld [vmem:[%s619] sm:$0x1]
      %v1481 = vperm.slane %v1479, 0
      %v1483 = vadd.f32 %v1475, %v1481
      %v1484 = vadd.f32 %v1476, %v1481
      %v1485 = vadd.f32 %v1477, %v1481
      %v1486 = vadd.f32 %v1478, %v1481
      %v1487 = vld [vmem:[%s622] sm:$0x1]
      %v1488 = vld [vmem:[%s625] sm:$0x1]
      %v1489 = vsel %vm668, %v1483, 0.0
      %1490 = vadd.xlane.f32.xlu0 %v1489
      %v1491 = vpop.xlane.xlu0 %1490
      %v1492 = vsel %vm668, %v1484, 0.0
      %1493 = vadd.xlane.f32.xlu0 %v1492
      %v1494 = vpop.xlane.xlu0 %1493
      %v1495 = vsel %vm668, %v1485, 0.0
      %1496 = vadd.xlane.f32.xlu0 %v1495
      %v1497 = vpop.xlane.xlu0 %1496
      %v1498 = vsel %vm668, %v1486, 0.0
      %1499 = vadd.xlane.f32.xlu0 %v1498
      %v1500 = vpop.xlane.xlu0 %1499
      %v1501 = vmul.f32 %v1491, %v687
      %v1502 = vmul.f32 %v1494, %v687
      %v1503 = vmul.f32 %v1497, %v687
      %v1504 = vmul.f32 %v1500, %v687
      %v1505 = vsub.f32 %v1483, %v1501
      %v1506 = vsub.f32 %v1484, %v1502
      %v1507 = vsub.f32 %v1485, %v1503
      %v1508 = vsub.f32 %v1486, %v1504
      %v1509 = vmul.f32 %v1505, %v1505
      %v1510 = vmul.f32 %v1506, %v1506
      %v1511 = vmul.f32 %v1507, %v1507
      %v1512 = vmul.f32 %v1508, %v1508
      %v1513 = vsel %vm668, %v1509, 0.0
      %1514 = vadd.xlane.f32.xlu0 %v1513
      %v1515 = vpop.xlane.xlu0 %1514
      %v1516 = vsel %vm668, %v1510, 0.0
      %1517 = vadd.xlane.f32.xlu0 %v1516
      %v1518 = vpop.xlane.xlu0 %1517
      %v1519 = vsel %vm668, %v1511, 0.0
      %1520 = vadd.xlane.f32.xlu0 %v1519
      %v1521 = vpop.xlane.xlu0 %1520
      %v1522 = vsel %vm668, %v1512, 0.0
      %1523 = vadd.xlane.f32.xlu0 %v1522
      %v1524 = vpop.xlane.xlu0 %1523
      %v1525 = vmul.f32 %v1515, %v687
      %v1526 = vmul.f32 %v1518, %v687
      %v1527 = vmul.f32 %v1521, %v687
      %v1528 = vmul.f32 %v1524, %v687
      %v1529 = vadd.f32 %v1525, 1e-05
      %v1530 = vadd.f32 %v1526, 1e-05
      %v1531 = vadd.f32 %v1527, 1e-05
      %v1532 = vadd.f32 %v1528, 1e-05
      %v1533 = vrsqrt.pop %v1529
      %v1534 = vmul.f32 %v1533, %v1529
      %v1535 = vmul.f32 %v1534, %v1533
      %v1536 = vmul.f32 0.5, %v1535
      %v1537 = vsub.f32 1.5, %v1536
      %v1538 = vmul.f32 %v1533, %v1537
      %vm1539 = vweird.f32 %v1529
      %vm1540 = vweird.f32 %v1533
      %vm1541 = vmor %vm1539, %vm1540
      %v1542 = vsel %vm1541, %v1533, %v1538
      %v1543 = vrsqrt.pop %v1530
      %v1544 = vmul.f32 %v1543, %v1530
      %v1545 = vmul.f32 %v1544, %v1543
      %v1546 = vmul.f32 0.5, %v1545
      %v1547 = vsub.f32 1.5, %v1546
      %v1548 = vmul.f32 %v1543, %v1547
      %vm1549 = vweird.f32 %v1530
      %vm1550 = vweird.f32 %v1543
      %vm1551 = vmor %vm1549, %vm1550
      %v1552 = vsel %vm1551, %v1543, %v1548
      %v1553 = vrsqrt.pop %v1531
      %v1554 = vmul.f32 %v1553, %v1531
      %v1555 = vmul.f32 %v1554, %v1553
      %v1556 = vmul.f32 0.5, %v1555
      %v1557 = vsub.f32 1.5, %v1556
      %v1558 = vmul.f32 %v1553, %v1557
      %vm1559 = vweird.f32 %v1531
      %vm1560 = vweird.f32 %v1553
      %vm1561 = vmor %vm1559, %vm1560
      %v1562 = vsel %vm1561, %v1553, %v1558
      %v1563 = vrsqrt.pop %v1532
      %v1564 = vmul.f32 %v1563, %v1532
      %v1565 = vmul.f32 %v1564, %v1563
      %v1566 = vmul.f32 0.5, %v1565
      %v1567 = vsub.f32 1.5, %v1566
      %v1568 = vmul.f32 %v1563, %v1567
      %vm1569 = vweird.f32 %v1532
      %vm1570 = vweird.f32 %v1563
      %vm1571 = vmor %vm1569, %vm1570
      %v1572 = vsel %vm1571, %v1563, %v1568
      %v1573 = vmul.f32 %v1505, %v1542
      %v1574 = vmul.f32 %v1506, %v1552
      %v1575 = vmul.f32 %v1507, %v1562
      %v1576 = vmul.f32 %v1508, %v1572
      %v1578 = vperm.slane %v1487, 0
      %v1580 = vmul.f32 %v1573, %v1578
      %v1581 = vmul.f32 %v1574, %v1578
      %v1582 = vmul.f32 %v1575, %v1578
      %v1583 = vmul.f32 %v1576, %v1578
      %v1585 = vperm.slane %v1488, 0
      %v1587 = vadd.f32 %v1580, %v1585
      %v1588 = vadd.f32 %v1581, %v1585
      %v1589 = vadd.f32 %v1582, %v1585
      %v1590 = vadd.f32 %v1583, %v1585
      %v1591 = vpack.c.bf16 %v1588, %v1587
      %v1592 = vpack.c.bf16 %v1590, %v1589
      %v1593 = vld [vmem:[%s630] sm:$0xf]
      %v1594 = vld [vmem:[%s630 + $0x4] sm:$0xf]
      %v1595 = vld [vmem:[%s630 + $0x8] sm:$0xf]
      %v1596 = vld [vmem:[%s630 + $0xc] sm:$0xf]
      %v1597 = vld [vmem:[%s633] sm:$0x1]
      %v1599 = vperm.slane %v1597, 0
      %v1605 = vunpack.c.l.b16 %v1593
      %v1606 = vunpack.c.l.b16 %v1594
      %v1607 = vunpack.c.l.b16 %v1595
      %v1608 = vunpack.c.l.b16 %v1596
      %v1609 = vpack.c.b16 %v1606, %v1605
      %v1610 = vpack.c.b16 %v1608, %v1607
      %v1614 = vsel %vm668, %v1591, 0
      %v1617 = vsel %vm668, %v1592, 0
      %1619 = vmatpush.bf16.msra.mxu0 0
      %1620 = vmatpush.bf16.msra.mxu0 0
      %1621 = vmatpush.bf16.msra.mxu0 0
      %1622 = vmatpush.bf16.msra.mxu0 0
      %1623 = vmatpush.bf16.msra.mxu0 0
      %1624 = vmatpush.bf16.msra.mxu0 0
      %1625 = vmatpush.bf16.msra.mxu0 %v1610
      %1626 = vmatpush.bf16.msra.mxu0 %v1609
      %1627 = vmatmul.bf16.gmra.mxu0 %v1614
      %v1628 = vpop.f32.mrf.mxu0
      %v1629 = vadd.f32 %v1599, %v1628
      %v1630 = vpop.f32.mrf.mxu0
      %v1631 = vadd.f32 %v1599, %v1630
      %1632 = vmatmul.bf16.gmra.mxu0 %v1617
      %v1633 = vpop.f32.mrf.mxu0
      %v1634 = vadd.f32 %v1599, %v1633
      %v1635 = vpop.f32.mrf.mxu0
      %v1636 = vadd.f32 %v1599, %v1635
      %1637 = vdwg.mxu0
      %v1638 = vmul.f32 %v1629, 0.5
      %v1639 = vmul.f32 %v1631, 0.5
      %v1640 = vmul.f32 %v1634, 0.5
      %v1641 = vmul.f32 %v1636, 0.5
      %v1642 = vmul.f32 %v1629, 0.044715
      %v1643 = vmul.f32 %v1631, 0.044715
      %v1644 = vmul.f32 %v1634, 0.044715
      %v1645 = vmul.f32 %v1636, 0.044715
      %v1646 = vmul.f32 %v1642, %v1629
      %v1647 = vmul.f32 %v1643, %v1631
      %v1648 = vmul.f32 %v1644, %v1634
      %v1649 = vmul.f32 %v1645, %v1636
      %v1650 = vmul.f32 %v1646, %v1629
      %v1651 = vmul.f32 %v1647, %v1631
      %v1652 = vmul.f32 %v1648, %v1634
      %v1653 = vmul.f32 %v1649, %v1636
      %v1654 = vadd.f32 %v1629, %v1650
      %v1655 = vadd.f32 %v1631, %v1651
      %v1656 = vadd.f32 %v1634, %v1652
      %v1657 = vadd.f32 %v1636, %v1653
      %v1658 = vmul.f32 %v1654, 0.7978846
      %v1659 = vmul.f32 %v1655, 0.7978846
      %v1660 = vmul.f32 %v1656, 0.7978846
      %v1661 = vmul.f32 %v1657, 0.7978846
      %v1662 = vtanh.pop %v1658
      %v1663 = vtanh.pop %v1659
      %v1664 = vtanh.pop %v1660
      %v1665 = vtanh.pop %v1661
      %v1666 = vadd.f32 %v1662, 1.0
      %v1667 = vadd.f32 %v1663, 1.0
      %v1668 = vadd.f32 %v1664, 1.0
      %v1669 = vadd.f32 %v1665, 1.0
      %v1670 = vmul.f32 %v1638, %v1666
      %v1671 = vmul.f32 %v1639, %v1667
      %v1672 = vmul.f32 %v1640, %v1668
      %v1673 = vmul.f32 %v1641, %v1669
      %v1674 = vpack.c.bf16 %v1671, %v1670
      %v1675 = vpack.c.bf16 %v1673, %v1672
      %v1676 = vld [vmem:[%s638] sm:$0xf]
      %v1677 = vld [vmem:[%s638 + $0x4] sm:$0xf]
      %v1678 = vld [vmem:[%s638 + $0x8] sm:$0xf]
      %v1679 = vld [vmem:[%s638 + $0xc] sm:$0xf]
      %v1680 = vld [vmem:[%s638 + $0x10] sm:$0xf]
      %v1681 = vld [vmem:[%s638 + $0x14] sm:$0xf]
      %v1682 = vld [vmem:[%s638 + $0x18] sm:$0xf]
      %v1683 = vld [vmem:[%s638 + $0x1c] sm:$0xf]
      %v1684 = vld [vmem:[%s638 + $0x20] sm:$0xf]
      %v1685 = vld [vmem:[%s638 + $0x24] sm:$0xf]
      %v1686 = vld [vmem:[%s638 + $0x28] sm:$0xf]
      %v1687 = vld [vmem:[%s638 + $0x2c] sm:$0xf]
      %v1688 = vld [vmem:[%s638 + $0x30] sm:$0xf]
      %v1689 = vld [vmem:[%s638 + $0x34] sm:$0xf]
      %v1690 = vld [vmem:[%s638 + $0x38] sm:$0xf]
      %v1691 = vld [vmem:[%s638 + $0x3c] sm:$0xf]
      %v1708 = vunpack.c.l.b16 %v1676
      %v1709 = vunpack.c.l.b16 %v1677
      %v1710 = vunpack.c.l.b16 %v1678
      %v1711 = vunpack.c.l.b16 %v1679
      %v1712 = vunpack.c.l.b16 %v1680
      %v1713 = vunpack.c.l.b16 %v1681
      %v1714 = vunpack.c.l.b16 %v1682
      %v1715 = vunpack.c.l.b16 %v1683
      %v1716 = vunpack.c.l.b16 %v1684
      %v1717 = vunpack.c.l.b16 %v1685
      %v1718 = vunpack.c.l.b16 %v1686
      %v1719 = vunpack.c.l.b16 %v1687
      %v1720 = vunpack.c.l.b16 %v1688
      %v1721 = vunpack.c.l.b16 %v1689
      %v1722 = vunpack.c.l.b16 %v1690
      %v1723 = vunpack.c.l.b16 %v1691
      %v1724 = vpack.c.b16 %v1709, %v1708
      %v1725 = vpack.c.b16 %v1711, %v1710
      %v1726 = vpack.c.b16 %v1713, %v1712
      %v1727 = vpack.c.b16 %v1715, %v1714
      %v1728 = vpack.c.b16 %v1717, %v1716
      %v1729 = vpack.c.b16 %v1719, %v1718
      %v1730 = vpack.c.b16 %v1721, %v1720
      %v1731 = vpack.c.b16 %v1723, %v1722
      %1740 = vmatpush.bf16.msra.mxu0 %v1731
      %1741 = vmatpush.bf16.msra.mxu0 %v1730
      %1742 = vmatpush.bf16.msra.mxu0 %v1729
      %1743 = vmatpush.bf16.msra.mxu0 %v1728
      %1744 = vmatpush.bf16.msra.mxu0 %v1727
      %1745 = vmatpush.bf16.msra.mxu0 %v1726
      %1746 = vmatpush.bf16.msra.mxu0 %v1725
      %1747 = vmatpush.bf16.msra.mxu0 %v1724
      %1748 = vmatmul.bf16.gmra.mxu0 %v1674
      %v1749 = vpop.f32.mrf.mxu0
      %v1750 = vadd.f32 0.0, %v1749
      %v1751 = vpop.f32.mrf.mxu0
      %v1752 = vadd.f32 0.0, %v1751
      %1753 = vmatmul.bf16.gmra.mxu0 %v1675
      %v1754 = vpop.f32.mrf.mxu0
      %v1755 = vadd.f32 0.0, %v1754
      %v1756 = vpop.f32.mrf.mxu0
      %v1757 = vadd.f32 0.0, %v1756
      %1758 = vdwg.mxu0
      %v1759 = vadd.f32 %v1483, %v1750
      %v1760 = vadd.f32 %v1484, %v1752
      %v1761 = vadd.f32 %v1485, %v1755
      %v1762 = vadd.f32 %v1486, %v1757
      %v1763 = vld [vmem:[%s641] sm:$0x1]
      %v1765 = vperm.slane %v1763, 0
      %v1767 = vadd.f32 %v1759, %v1765
      %v1768 = vadd.f32 %v1760, %v1765
      %v1769 = vadd.f32 %v1761, %v1765
      %v1770 = vadd.f32 %v1762, %v1765
      %1771 = vst.msk [vmem:[#allocation2] sm:$0xff] %vm668, %v1767
      %1772 = vst.msk [vmem:[#allocation2 + $0x8] sm:$0xff] %vm668, %v1768
      %1773 = vst.msk [vmem:[#allocation2 + $0x10] sm:$0xff] %vm668, %v1769
      %1774 = vst.msk [vmem:[#allocation2 + $0x18] sm:$0xff] %vm668, %v1770
      %p1775 = scmp.eq.s32.totalorder %s29, 1
      // Predicated region
      $region77: #{_lambda_.4} parent=71 // pred_check
        %p1776 = pneg %p1775
      $region78: #{_lambda_.4} parent=71 // pred_check_branch
        %1778 = sbr.rel (%p1776) target = $region80
      $region79: #{_lambda_.4} parent=71 // pred_region
        %1779 = vst.msk [vmem:[%s646] sm:$0xff] %vm668, %v1767
        %1780 = vst.msk [vmem:[%s646 + $0x8] sm:$0xff] %vm668, %v1768
        %1781 = vst.msk [vmem:[%s646 + $0x10] sm:$0xff] %vm668, %v1769
        %1782 = vst.msk [vmem:[%s646 + $0x18] sm:$0xff] %vm668, %v1770
      $region80: #{_lambda_.4} parent=71 // pred_fallthru
        _
      %s1783 = smul.u32 4, %s28
      %p1784 = scmp.lt.s32.totalorder %s1783, 3
      %s1785 = scalar_select %p1784, %s1783, 3
      %s1786 = smul.addr %s1785, 8
      %s1787 = scalar_lea.vmem %s13, %s1786
      // Predicated region
      $region81: #{_lambda_.4} parent=71 // pred_check
        %p1788 = pneg %p392
      $region82: #{_lambda_.4} parent=71 // pred_check_branch
        %1790 = sbr.rel (%p1788) target = $region84
      $region83: #{_lambda_.4} parent=71 // pred_region
        %s1791 = smul.u32 4, %s28
      $region84: #{_lambda_.4} parent=71 // pred_fallthru
        _
      // Predicated region
      $region85: #{_lambda_.4} parent=71 // pred_check
        %p1792 = pneg %p392
      $region86: #{_lambda_.4} parent=71 // pred_check_branch
        %1794 = sbr.rel (%p1792) target = $region88
      $region87: #{_lambda_.4} parent=71 // pred_region
        %s1795 = smul.u32 4, %s28
        %p1796 = scmp.lt.s32.totalorder %s1795, 3
        %s1797 = scalar_select %p1796, %s1795, 3
        %s1798 = smul.addr %s1797, 8
        %s1799 = scalar_lea.vmem %s13, %s1798
      $region88: #{_lambda_.4} parent=71 // pred_fallthru
        _
    $region72: #{_lambda_.4} parent=5 // pred_fallthru
      _
    %p1800 = scmp.le.s32.totalorder 2, %s19
    // Predicated region
    $region89: #{_lambda_.4} parent=5 // pred_check
      %p1801 = pneg %p1800
    $region90: #{_lambda_.4} parent=5 // pred_check_branch
      %1803 = sbr.rel (%p1801) target = $region92
    $region91: #{_lambda_.4} parent=5 // pred_region
      %s1804 = ssub.s32 %s19, 2
    $region92: #{_lambda_.4} parent=5 // pred_fallthru
      _
  $region6: #{_lambda_.4} parent=0 // loop_footer
    %s23 = sadd.s32 1, %s19
  $region7: #{_lambda_.4} parent=0 // loop_footer_branch
    %18 = sbr.rel target = $region3
  $region8: #{_lambda_.4} parent=0 // loop_exit
    _

</llo_original>
